<compile_context>
chip_gen: v5e
topology: v5e:2x2
jax: 0.10.0
libtpu: 0.0.40
codegen_flags: <defaults>
</compile_context>

<pallas_src>
import math
from collections import namedtuple
from functools import partial

import jax
import jax.numpy as jnp
from jax.experimental import pallas as pl
from jax.experimental.pallas import tpu as pltpu


# ---------------------------------------------------------------------------
# static configuration containers (hashable -> usable as jit static args)
# ---------------------------------------------------------------------------

ConvCfg = namedtuple("ConvCfg", ["kh", "kw", "cin", "cout", "stride", "dilation", "pad"])
BlockCfg = namedtuple("BlockCfg", ["c1", "c2", "c3", "ds"])
HeadCfg = namedtuple("HeadCfg",
                     ["aspp1", "aspp2", "aspp3", "aspp4", "aspp5", "enc", "num_classes"])
ModelCfg = namedtuple("ModelCfg", ["stem", "layers", "head"])


# ---------------------------------------------------------------------------
# tiling helpers
# ---------------------------------------------------------------------------

_TM_MAX = 512          # bigger M tiles for the large-M early layers (review item)
_TN_MAX = 512          # N-tiling exposes parallelism on wide-N deep layers (v7x)
_TK_TARGET = 1024


def _round_up(x, m):
    return ((x + m - 1) // m) * m


def _pick_m_tiling(M):
    Mp = _round_up(M, 8)
    if Mp <= _TM_MAX:
        return Mp, Mp, 1
    Mp = _round_up(M, _TM_MAX)
    return Mp, _TM_MAX, Mp // _TM_MAX


def _pick_n_tiling(Np):
    if Np <= _TN_MAX or Np % _TN_MAX != 0:
        return Np, 1
    return _TN_MAX, Np // _TN_MAX


def _k_layout(K):
    """Padded K, K tile and number of K steps.  Chosen so that K is never re-padded at
    run time for the shapes in this network (exact divisors, full-dim blocks K<=1024)."""
    if K <= _TK_TARGET:
        Kp = K if K % 8 == 0 else _round_up(K, 128)
        return Kp, Kp, 1
    Kp = _round_up(K, 128)
    nk = -(-Kp // _TK_TARGET)
    while Kp % (nk * 128) != 0:
        nk += 1
    return Kp, Kp // nk, nk


# ---------------------------------------------------------------------------
# Pallas GEMM kernels (fused scale/bias/residual/ReLU epilogue)
# ---------------------------------------------------------------------------

def _mm_kernel(*refs, relu, has_res):
    """Grid (nm, nn, nk): K-reduction variant with an f32 VMEM accumulator."""
    if has_res:
        a_ref, b_ref, s_ref, c_ref, r_ref, o_ref, acc_ref = refs
    else:
        a_ref, b_ref, s_ref, c_ref, o_ref, acc_ref = refs
        r_ref = None

    k = pl.program_id(2)

    @pl.when(k == 0)
    def _():
        acc_ref[...] = jnp.dot(a_ref[...], b_ref[...],
                               preferred_element_type=jnp.float32)

    @pl.when(k > 0)
    def _():
        acc_ref[...] += jnp.dot(a_ref[...], b_ref[...],
                                preferred_element_type=jnp.float32)

    @pl.when(k == pl.num_programs(2) - 1)
    def _():
        out = acc_ref[...] * s_ref[...] + c_ref[...]
        if has_res:
            out = out + r_ref[...].astype(jnp.float32)
        if relu:
            out = jnp.maximum(out, 0.0)
        o_ref[...] = out.astype(o_ref.dtype)


def _mm_kernel_nored(*refs, relu, has_res):
    """Grid (nm, nn): single K step, no accumulator scratch."""
    if has_res:
        a_ref, b_ref, s_ref, c_ref, r_ref, o_ref = refs
    else:
        a_ref, b_ref, s_ref, c_ref, o_ref = refs
        r_ref = None
    out = jnp.dot(a_ref[...], b_ref[...], preferred_element_type=jnp.float32)
    out = out * s_ref[...] + c_ref[...]
    if has_res:
        out = out + r_ref[...].astype(jnp.float32)
    if relu:
        out = jnp.maximum(out, 0.0)
    o_ref[...] = out.astype(o_ref.dtype)


def matmul_prepped(a, wp, scale_p, bias_p, n_out, residual=None, relu=False,
                   out_dtype=jnp.bfloat16):
    """out = relu?((a @ W) * scale + bias [+ residual]) with pre-padded bf16 weights.

    a: (M, Kp)  wp: (Kp, Np) bf16 (pre-cast/padded at build time)
    scale_p/bias_p: (1, Np) f32  residual: optional (M, n_out)
    """
    M, Ka = a.shape
    Kp, Np = wp.shape
    _, TK, nk = _k_layout(Kp)
    Mp, TM, nm = _pick_m_tiling(M)
    TN, nn = _pick_n_tiling(Np)

    a = a.astype(jnp.bfloat16)
    if Mp != M or Kp != Ka:
        a = jnp.pad(a, ((0, Mp - M), (0, Kp - Ka)))

    has_res = residual is not None
    inputs = [a, wp, scale_p, bias_p]

    if nk == 1:
        grid = (nm, nn)
        sem = ("parallel", "parallel")
        in_specs = [
            pl.BlockSpec((TM, TK), lambda m, n: (m, 0)),
            pl.BlockSpec((TK, TN), lambda m, n: (0, n)),
            pl.BlockSpec((1, TN), lambda m, n: (0, n)),
            pl.BlockSpec((1, TN), lambda m, n: (0, n)),
        ]
        res_spec = pl.BlockSpec((TM, TN), lambda m, n: (m, n))
        out_spec = pl.BlockSpec((TM, TN), lambda m, n: (m, n))
        scratch = []
        kern = partial(_mm_kernel_nored, relu=relu, has_res=has_res)
    else:
        grid = (nm, nn, nk)
        sem = ("parallel", "parallel", "arbitrary")
        in_specs = [
            pl.BlockSpec((TM, TK), lambda m, n, k: (m, k)),
            pl.BlockSpec((TK, TN), lambda m, n, k: (k, n)),
            pl.BlockSpec((1, TN), lambda m, n, k: (0, n)),
            pl.BlockSpec((1, TN), lambda m, n, k: (0, n)),
        ]
        res_spec = pl.BlockSpec((TM, TN), lambda m, n, k: (m, n))
        out_spec = pl.BlockSpec((TM, TN), lambda m, n, k: (m, n))
        scratch = [pltpu.VMEM((TM, TN), jnp.float32)]
        kern = partial(_mm_kernel, relu=relu, has_res=has_res)

    if has_res:
        r = residual
        if Mp != M or Np != n_out:
            r = jnp.pad(r, ((0, Mp - M), (0, Np - n_out)))
        in_specs.append(res_spec)
        inputs.append(r)

    out_bytes = jnp.dtype(out_dtype).itemsize
    cost = pl.CostEstimate(
        flops=2 * Mp * Kp * Np,
        transcendentals=0,
        bytes_accessed=(Mp * Kp * 2 + Kp * Np * 2 + Mp * Np * out_bytes
                        + (Mp * Np * 2 if has_res else 0) + 8 * Np))

    out = pl.pallas_call(
        kern,
        out_shape=jax.ShapeDtypeStruct((Mp, Np), out_dtype),
        grid_spec=pltpu.PrefetchScalarGridSpec(
            num_scalar_prefetch=0,
            grid=grid,
            in_specs=in_specs,
            out_specs=out_spec,
            scratch_shapes=scratch),
        compiler_params=pltpu.CompilerParams(
            dimension_semantics=sem,
            vmem_limit_bytes=32 * 1024 * 1024),
        cost_estimate=cost,
    )(*inputs)

    if Mp != M or Np != n_out:
        out = out[:M, :n_out]
    return out


# ---------------------------------------------------------------------------
# other Pallas kernels: global average pool, fused projection head
# ---------------------------------------------------------------------------

def _gap_kernel(x_ref, o_ref):
    o_ref[...] = jnp.mean(x_ref[...].astype(jnp.float32), axis=1, keepdims=True)


def global_avg_pool(x):
    """x: (N, HW, C) -> (N, 1, C) spatial mean (f32 output)."""
    N, HW, C = x.shape
    return pl.pallas_call(
        _gap_kernel,
        out_shape=jax.ShapeDtypeStruct((N, 1, C), jnp.float32),
        grid=(N,),
        in_specs=[pl.BlockSpec((1, HW, C), lambda i: (i, 0, 0))],
        out_specs=pl.BlockSpec((1, 1, C), lambda i: (i, 0, 0)),
        compiler_params=pltpu.CompilerParams(
            dimension_semantics=("parallel",)),
    )(x)


def _proj_kernel(x_ref, w1_ref, b1_ref, w2_ref, b2_ref, o_ref):
    h = jnp.dot(x_ref[...], w1_ref[...], preferred_element_type=jnp.float32)
    h = jnp.maximum(h + b1_ref[...], 0.0)
    out = jnp.dot(h.astype(w2_ref.dtype), w2_ref[...],
                  preferred_element_type=jnp.float32) + b2_ref[...]
    o_ref[...] = out


def proj_head(pooled, fc_arrs, num_classes):
    """Fused Linear(256,256) + ReLU + Linear(256,num_classes) in one Pallas launch."""
    w1p, b1p, w2p, b2p = fc_arrs
    B, D = pooled.shape
    Bp = _round_up(B, 8)
    NCp = w2p.shape[1]
    x = pooled.astype(jnp.bfloat16)
    if Bp != B:
        x = jnp.pad(x, ((0, Bp - B), (0, 0)))
    out = pl.pallas_call(
        _proj_kernel,
        out_shape=jax.ShapeDtypeStruct((Bp, NCp), jnp.float32),
        grid=(1,),
        in_specs=[pl.BlockSpec((Bp, D), lambda i: (0, 0)),
                  pl.BlockSpec((D, D), lambda i: (0, 0)),
                  pl.BlockSpec((1, D), lambda i: (0, 0)),
                  pl.BlockSpec((D, NCp), lambda i: (0, 0)),
                  pl.BlockSpec((1, NCp), lambda i: (0, 0))],
        out_specs=pl.BlockSpec((Bp, NCp), lambda i: (0, 0)),
        compiler_params=pltpu.CompilerParams(
            dimension_semantics=("arbitrary",)),
    )(x, w1p, b1p, w2p, b2p)
    return out[:B, :num_classes]


# ---------------------------------------------------------------------------
# JAX glue (im2col conv, maxpool) around the Pallas GEMM
# ---------------------------------------------------------------------------

def conv_affine(x, arrs, cfg: ConvCfg, relu=False, residual=None,
                out_dtype=jnp.bfloat16):
    """Conv2d (no bias) + folded BN scale/bias (+residual) (+ReLU).  x: NHWC (bf16)."""
    wp, sp, bp = arrs
    N, H, W, Cin = x.shape
    kh, kw, s, d, p = cfg.kh, cfg.kw, cfg.stride, cfg.dilation, cfg.pad
    Ho = (H + 2 * p - d * (kh - 1) - 1) // s + 1
    Wo = (W + 2 * p - d * (kw - 1) - 1) // s + 1
    K = kh * kw * Cin
    Kp = _k_layout(K)[0]

    if p > 0:
        x = jnp.pad(x, ((0, 0), (p, p), (p, p), (0, 0)))

    if kh == 1 and kw == 1 and s == 1:
        A = x.reshape(N * H * W, Cin)
        if Kp != K:
            A = jnp.pad(A, ((0, 0), (0, Kp - K)))
    else:
        # TODO(synk): im2col materialized in HBM; fuse the tap loop into the GEMM's K grid.
        cols = []
        for i in range(kh):
            for j in range(kw):
                di, dj = i * d, j * d
                cols.append(x[:, di:di + (Ho - 1) * s + 1:s,
                              dj:dj + (Wo - 1) * s + 1:s, :])
        if Kp != K:  # zero-fill the K padding inside the (already materialized) concat
            cols.append(jnp.zeros((N, Ho, Wo, Kp - K), dtype=x.dtype))
        A = cols[0] if len(cols) == 1 else jnp.concatenate(cols, axis=-1)
        A = A.reshape(N * Ho * Wo, Kp)

    res2 = None if residual is None else residual.reshape(N * Ho * Wo, cfg.cout)
    out = matmul_prepped(A, wp, sp, bp, n_out=cfg.cout, residual=res2,
                         relu=relu, out_dtype=out_dtype)
    return out.reshape(N, Ho, Wo, cfg.cout)


def maxpool_3x3_s2(x):
    """MaxPool2d(kernel=3, stride=2, padding=1), NHWC.  Pure fused XLA elementwise max
    chain (no 9x HBM stack, no extra pallas_call)."""
    N, H, W, C = x.shape
    Ho = (H + 2 - 3) // 2 + 1
    Wo = (W + 2 - 3) // 2 + 1
    xp = jnp.pad(x, ((0, 0), (1, 1), (1, 1), (0, 0)), constant_values=-jnp.inf)
    out = None
    for i in range(3):
        for j in range(3):
            tap = xp[:, i:i + (Ho - 1) * 2 + 1:2, j:j + (Wo - 1) * 2 + 1:2, :]
            out = tap if out is None else jnp.maximum(out, tap)
    return out


# ---------------------------------------------------------------------------
# forward-pass pieces (jitted per piece; cfg is a hashable static argument)
# ---------------------------------------------------------------------------

def stem_forward(x_nchw, arrs, cfg: ConvCfg):
    x = jnp.transpose(x_nchw, (0, 2, 3, 1)).astype(jnp.bfloat16)   # NCHW -> NHWC, bf16
    x = conv_affine(x, arrs, cfg, relu=True)
    return maxpool_3x3_s2(x)


def bottleneck_forward(x, arrs, cfg: BlockCfg):
    if cfg.ds is not None:
        identity = conv_affine(x, arrs["ds"], cfg.ds, relu=False)
    else:
        identity = x
    out = conv_affine(x, arrs["c1"], cfg.c1, relu=True)
    out = conv_affine(out, arrs["c2"], cfg.c2, relu=True)
    # conv3 + BN + residual-add + ReLU fused into one GEMM epilogue
    out = conv_affine(out, arrs["c3"], cfg.c3, relu=True, residual=identity)
    return out


def head_forward(x, arrs, cfg: HeadCfg):
    """ASPP -> encoder 1x1 -> global avg pool -> fused projection head."""
    N, H, W, C = x.shape
    b1 = conv_affine(x, arrs["aspp1"], cfg.aspp1, relu=True)
    b2 = conv_affine(x, arrs["aspp2"], cfg.aspp2, relu=True)
    b3 = conv_affine(x, arrs["aspp3"], cfg.aspp3, relu=True)
    b4 = conv_affine(x, arrs["aspp4"], cfg.aspp4, relu=True)
    gp = global_avg_pool(x.reshape(N, H * W, C)).reshape(N, 1, 1, C)
    b5 = conv_affine(gp, arrs["aspp5"], cfg.aspp5, relu=True)
    b5 = jnp.broadcast_to(b5, (N, H, W, b5.shape[-1]))   # 1x1 bilinear upsample == broadcast
    cat = jnp.concatenate([b1, b2, b3, b4, b5], axis=-1)          # (N, H, W, 1280) bf16
    # Encoder head: 1x1 conv 1280->256 + BN + ReLU (Dropout == identity, eval mode)
    x = conv_affine(cat, arrs["enc"], cfg.enc, relu=True)
    # AdaptiveAvgPool2d((1,1)) + flatten
    pooled = global_avg_pool(x.reshape(N, H * W, x.shape[-1])).reshape(N, x.shape[-1])
    return proj_head(pooled, arrs["fc"], cfg.num_classes)


_stem_fwd = jax.jit(stem_forward, static_argnames=("cfg",))
_block_fwd = jax.jit(bottleneck_forward, static_argnames=("cfg",))
_head_fwd = jax.jit(head_forward, static_argnames=("cfg",))


def deeplab0_forward(arrs, cfg: ModelCfg, x0, x1):
    """Both images are stacked into one batch (BN is folded inference-mode, so there is
    no cross-sample coupling); logits are split at the end -> (q, k)."""
    B = x0.shape[0]
    x = jnp.concatenate([x0, x1], axis=0)
    x = _stem_fwd(x, arrs["stem"], cfg=cfg.stem)
    for layer_arrs, layer_cfgs in zip(arrs["layers"], cfg.layers):
        for barr, bcfg in zip(layer_arrs, layer_cfgs):
            x = _block_fwd(x, barr, cfg=bcfg)
    logits = _head_fwd(x, arrs["head"], cfg=cfg.head)
    return logits[:B], logits[B:]


# ---------------------------------------------------------------------------
# deterministic parameter construction + one-time GEMM-layout weight prep
# ---------------------------------------------------------------------------

class DetInit:
    def __init__(self, seed=0):
        self._key = jax.random.PRNGKey(seed)
        self._n = 0

    def normal(self, shape, std=1.0):
        self._n += 1
        k = jax.random.fold_in(self._key, self._n)
        return std * jax.random.normal(k, shape, dtype=jnp.float32)


def _prep_conv(init, kh, kw, cin, cout, stride=1, dilation=1, pad=0):
    """Create a conv weight + folded-BN scale/bias and pre-pack them for the GEMM:
    weight -> (Kp, Np) bf16, scale/bias -> (1, Np) f32.  Done once, at build time."""
    fan_in = kh * kw * cin
    w = init.normal((kh, kw, cin, cout), std=0.5 * math.sqrt(2.0 / fan_in))
    scale = 1.0 + 0.05 * init.normal((cout,))
    bias = 0.05 * init.normal((cout,))

    K = kh * kw * cin
    Kp = _k_layout(K)[0]
    Np = max(128, _round_up(cout, 128))
    wq = w.reshape(K, cout).astype(jnp.bfloat16)
    if Kp != K or Np != cout:
        wq = jnp.pad(wq, ((0, Kp - K), (0, Np - cout)))
    sp = scale.reshape(1, cout).astype(jnp.float32)
    bp = bias.reshape(1, cout).astype(jnp.float32)
    if Np != cout:
        sp = jnp.pad(sp, ((0, 0), (0, Np - cout)))
        bp = jnp.pad(bp, ((0, 0), (0, Np - cout)))
    return (wq, sp, bp), ConvCfg(kh, kw, cin, cout, stride, dilation, pad)


def _prep_bottleneck(init, inplanes, planes, stride, dilation):
    c1a, c1c = _prep_conv(init, 1, 1, inplanes, planes)
    c2a, c2c = _prep_conv(init, 3, 3, planes, planes, stride=stride,
                          dilation=dilation, pad=dilation)
    c3a, c3c = _prep_conv(init, 1, 1, planes, planes * 4)
    if stride != 1 or inplanes != planes * 4:
        dsa, dsc = _prep_conv(init, 1, 1, inplanes, planes * 4, stride=stride)
    else:
        dsa, dsc = None, None
    return {"c1": c1a, "c2": c2a, "c3": c3a, "ds": dsa}, BlockCfg(c1c, c2c, c3c, dsc)


def build_model(in_channels=3, num_classes=2, seed=0):
    init = DetInit(seed)
    arrs = {}

    # ResNet-101 stem
    stem_a, stem_c = _prep_conv(init, 7, 7, in_channels, 64, stride=2, pad=3)
    arrs["stem"] = stem_a

    # layers: (planes, n_blocks, stride, dilation) -- output_stride = 16
    layer_cfg = [(64, 3, 1, 1), (128, 4, 2, 1), (256, 23, 2, 1), (512, 3, 1, 2)]
    inplanes = 64
    layer_arrs, layer_cfgs = [], []
    for planes, nblocks, stride, dilation in layer_cfg:
        blocks_a, blocks_c = [], []
        for bi in range(nblocks):
            s = stride if bi == 0 else 1
            a, c = _prep_bottleneck(init, inplanes, planes, s, dilation)
            blocks_a.append(a)
            blocks_c.append(c)
            inplanes = planes * 4
        layer_arrs.append(blocks_a)
        layer_cfgs.append(tuple(blocks_c))
    arrs["layers"] = layer_arrs

    # ASPP (output_stride=16 -> dilations 1, 6, 12, 18), each branch 2048 -> 256
    a1, c1 = _prep_conv(init, 1, 1, 2048, 256)
    a2, c2 = _prep_conv(init, 3, 3, 2048, 256, dilation=6, pad=6)
    a3, c3 = _prep_conv(init, 3, 3, 2048, 256, dilation=12, pad=12)
    a4, c4 = _prep_conv(init, 3, 3, 2048, 256, dilation=18, pad=18)
    a5, c5 = _prep_conv(init, 1, 1, 2048, 256)          # global-pool branch
    ae, ce = _prep_conv(init, 1, 1, 1280, 256)          # encoder 1x1 conv

    # projection head: Linear(256,256) + ReLU + Linear(256,num_classes)  (pre-packed bf16)
    w1 = init.normal((256, 256), std=1.0 / math.sqrt(256))
    b1 = init.normal((256,), std=1.0 / math.sqrt(256))
    w2 = init.normal((256, num_classes), std=1.0 / math.sqrt(256))
    b2 = init.normal((num_classes,), std=1.0 / math.sqrt(256))
    ncp = max(128, _round_up(num_classes, 128))
    w2p = jnp.pad(w2.astype(jnp.bfloat16), ((0, 0), (0, ncp - num_classes)))
    b2p = jnp.pad(b2.reshape(1, -1).astype(jnp.float32), ((0, 0), (0, ncp - num_classes)))
    fc = (w1.astype(jnp.bfloat16), b1.reshape(1, -1).astype(jnp.float32), w2p, b2p)

    arrs["head"] = {"aspp1": a1, "aspp2": a2, "aspp3": a3, "aspp4": a4, "aspp5": a5,
                    "enc": ae, "fc": fc}
    cfg = ModelCfg(stem_c, tuple(layer_cfgs),
                   HeadCfg(c1, c2, c3, c4, c5, ce, num_classes))
    return arrs, cfg


# ---------------------------------------------------------------------------
if __name__ == "__main__":
    key = jax.random.PRNGKey(0)
    k1, k2 = jax.random.split(key)
    # small but stride-16-compatible input: batch=2, channels=3, spatial=64
    x0 = jax.random.normal(k1, (2, 3, 64, 64), dtype=jnp.float32)
    x1 = jax.random.normal(k2, (2, 3, 64, 64), dtype=jnp.float32)

    arrs, cfg = build_model(in_channels=3, num_classes=2, seed=0)
    q, k = deeplab0_forward(arrs, cfg, x0, x1)
    q, k = jax.block_until_ready((q, k))

    assert q.shape == (2, 2) and k.shape == (2, 2)
    assert bool(jnp.all(jnp.isfinite(q))) and bool(jnp.all(jnp.isfinite(k)))
    print("KERNEL_OK")
</pallas_src>

<mosaic_0001>
module attributes {stable_mosaic.version = 11 : i64} {
  func.func @_mm_kernel_nored(%arg0: i32, %arg1: i32, %arg2: memref<512x256xbf16, #tpu.memory_space<vmem>>, %arg3: memref<256x128xbf16, #tpu.memory_space<vmem>>, %arg4: memref<1x128xf32, #tpu.memory_space<vmem>>, %arg5: memref<1x128xf32, #tpu.memory_space<vmem>>, %arg6: memref<512x128xbf16, #tpu.memory_space<vmem>>) attributes {dimension_semantics = [#tpu.dimension_semantics<parallel>, #tpu.dimension_semantics<parallel>], iteration_bounds = array<i64: 8, 1>, scalar_prefetch = 0 : i64, scratch_operands = 0 : i64, tpu.core_type = #tpu.core_type<tc>, window_params = [{transform_indices = @transform_0, window_bounds = array<i64: 512, 256>}, {transform_indices = @transform_1, window_bounds = array<i64: 256, 128>}, {transform_indices = @transform_2, window_bounds = array<i64: 1, 128>}, {transform_indices = @transform_3, window_bounds = array<i64: 1, 128>}, {transform_indices = @transform_4, window_bounds = array<i64: 512, 128>}]} {
    %c0 = arith.constant 0 : index
    %c0_0 = arith.constant 0 : index
    %0 = vector.load %arg2[%c0, %c0_0] : memref<512x256xbf16, #tpu.memory_space<vmem>>, vector<512x256xbf16>
    %c0_1 = arith.constant 0 : index
    %c0_2 = arith.constant 0 : index
    %1 = vector.load %arg3[%c0_1, %c0_2] : memref<256x128xbf16, #tpu.memory_space<vmem>>, vector<256x128xbf16>
    %cst = arith.constant dense<0.000000e+00> : vector<512x128xf32>
    %2 = tpu.matmul %0, %1, %cst {dimension_numbers = #tpu.dot_dimension_numbers<[1], [0], [0], [1], [0, 0, 1, 1], [], []>} : vector<512x256xbf16>, vector<256x128xbf16>, vector<512x128xf32> -> vector<512x128xf32>
    %c0_3 = arith.constant 0 : index
    %c0_4 = arith.constant 0 : index
    %3 = vector.load %arg4[%c0_3, %c0_4] : memref<1x128xf32, #tpu.memory_space<vmem>>, vector<1x128xf32>
    %4 = vector.broadcast %3 : vector<1x128xf32> to vector<512x128xf32>
    %5 = arith.mulf %2, %4 : vector<512x128xf32>
    %c0_5 = arith.constant 0 : index
    %c0_6 = arith.constant 0 : index
    %6 = vector.load %arg5[%c0_5, %c0_6] : memref<1x128xf32, #tpu.memory_space<vmem>>, vector<1x128xf32>
    %7 = vector.broadcast %6 : vector<1x128xf32> to vector<512x128xf32>
    %8 = arith.addf %5, %7 : vector<512x128xf32>
    %cst_7 = arith.constant 0.000000e+00 : f32
    %9 = vector.broadcast %cst_7 : f32 to vector<512x128xf32>
    %10 = arith.maximumf %8, %9 : vector<512x128xf32>
    %11 = arith.truncf %10 : vector<512x128xf32> to vector<512x128xbf16>
    %c0_8 = arith.constant 0 : index
    %c0_9 = arith.constant 0 : index
    %12 = vector.load %arg6[%c0_8, %c0_9] : memref<512x128xbf16, #tpu.memory_space<vmem>>, vector<512x128xbf16>
    tpu.vector_store %arg6[%c0_8, %c0_9], %11 {strides = array<i32>} : memref<512x128xbf16, #tpu.memory_space<vmem>>, vector<512x128xbf16>,
    return
  }
  func.func @transform_0(%arg0: i32, %arg1: i32) -> (i32, i32) {
    %c0_i32 = arith.constant 0 : i32
    %c0_i32_0 = arith.constant 0 : i32
    return %arg0, %c0_i32 : i32, i32
  }
  func.func @transform_1(%arg0: i32, %arg1: i32) -> (i32, i32) {
    %c0_i32 = arith.constant 0 : i32
    %c0_i32_0 = arith.constant 0 : i32
    return %c0_i32, %arg1 : i32, i32
  }
  func.func @transform_2(%arg0: i32, %arg1: i32) -> (i32, i32) {
    %c0_i32 = arith.constant 0 : i32
    %c0_i32_0 = arith.constant 0 : i32
    return %c0_i32, %arg1 : i32, i32
  }
  func.func @transform_3(%arg0: i32, %arg1: i32) -> (i32, i32) {
    %c0_i32 = arith.constant 0 : i32
    %c0_i32_0 = arith.constant 0 : i32
    return %c0_i32, %arg1 : i32, i32
  }
  func.func @transform_4(%arg0: i32, %arg1: i32) -> (i32, i32) {
    %c0_i32 = arith.constant 0 : i32
    return %arg0, %arg1 : i32, i32
  }
}

</mosaic_0001>

<llo_original>
// kernel: stem_forward.1
$region0: #{stem_forward.1}
  #allocation0 [shape = 'u32[]', space=smem, size = 0x4, offset = 0x4, fixed_abs, tag = 'smem constant byte address 0x4 - core index']
  #allocation1 [shape = 'u32[72,128]{1,0:T(1,128)}', space=vmem, size = 0x9000, scoped, tag = 'internal scratch']
  %s0 = inlined_call_operand.vmem [shape: bf16[4096,256], index: 0, kind: input, shape index: {}]
  %s1 = inlined_call_operand.vmem [shape: bf16[256,128], index: 1, kind: input, shape index: {}]
  %s2 = inlined_call_operand.vmem [shape: f32[1,128], index: 2, kind: input, shape index: {}]
  %s3 = inlined_call_operand.vmem [shape: f32[1,128], index: 3, kind: input, shape index: {}]
  %s4 = inlined_call_operand.vmem [shape: bf16[4096,128], index: 4, kind: output, shape index: {}]
  %s5 = sld [smem:[#allocation0]]
  $region49: #{stem_forward.1} parent=0
    _
  %s7 = ssub.s32 1, %s5
  %s8 = scalar_select 0, %s7, %s5
  loop: start=0, step=1, limit=10
  $region2: #{stem_forward.1} parent=0 // loop_pre_header
    _
  $region3: #{stem_forward.1} parent=0 // loop_header
    %s10 = sphi 0, %s14
    %p11 = scmp.ge.s32.totalorder %s10, 10
    %s17 = sphi 0, %s29
    %s18 = sphi 0, %s25
    %s19 = sphi 0, %s17
    %s20 = sphi 0, %s18
    %s21 = sphi 0, %s19
    %s22 = sphi 0, %s20
    %s32 = sphi 0, %s34
    %s35 = sphi 0, %s32
    %s36 = sphi 0, %s35
    %s52 = sphi 0, %s36
    %s58 = sphi 0, %s60
    %s61 = sphi 0, %s58
    %s62 = sphi 0, %s61
    %s78 = sphi 0, %s62
    %s84 = sphi 0, %s86
    %s87 = sphi 0, %s84
    %s88 = sphi 0, %s87
    %s104 = sphi 0, %s88
    %s110 = sphi 0, %s112
    %s113 = sphi 0, %s110
    %s114 = sphi 0, %s113
    %s130 = sphi 0, %s114
    %s138 = sphi 0, %s140
    %s141 = sphi 0, %s138
    %s142 = sphi 0, %s141
    %s158 = sphi 0, %s142
  $region4: #{stem_forward.1} parent=0 // loop_header_branch
    %13 = sbr.rel (%p11) target = $region8
  $region5: #{stem_forward.1} parent=0 // loop_body
    %s15 = ssub.s32 %s10, 1
    %s16 = ssub.s32 %s10, 2
    %s23 = sadd.s32 1, %s18
    %p24 = scmp.ge.s32.totalorder %s23, 1
    %s25 = scalar_select %p24, 0, %s23
    %s26 = sadd.s32 1, %s17
    %s27 = scalar_select %p24, %s26, %s17
    %p28 = scmp.ge.s32.totalorder %s27, 8
    %s29 = scalar_select %p28, 0, %s27
    %s30 = ssub.s32 %s17, %s29
    %p31 = scmp.eq.s32.totalorder %s30, 0
    %s33 = sadd.s32 %s32, 1
    %s34 = scalar_select %p31, %s32, %s33
    %p37 = pneg %p31
    %p38 = scmp.eq.s32.totalorder %s10, 7
    %p39 = por %p37, %p38
    %p40 = scmp.ne.s32.totalorder %s32, %s35
    %p41 = scmp.eq.s32.totalorder %s10, 0
    %p42 = por %p40, %p41
    %p43 = scmp.ne.s32.totalorder %s32, %s35
    %p44 = scmp.eq.s32.totalorder %s15, 7
    %p45 = por %p43, %p44
    %p46 = scmp.ne.s32.totalorder %s35, %s36
    %p47 = scmp.eq.s32.totalorder %s15, 0
    %p48 = por %p46, %p47
    %p49 = scmp.ne.s32.totalorder %s35, %s36
    %p50 = scmp.eq.s32.totalorder %s16, 7
    %p51 = por %p49, %p50
    %p53 = scmp.ne.s32.totalorder %s36, %s52
    %p54 = scmp.eq.s32.totalorder %s16, 0
    %p55 = por %p53, %p54
    %s56 = ssub.s32 %s18, %s25
    %p57 = scmp.eq.s32.totalorder %s56, 0
    %s59 = sadd.s32 %s58, 1
    %s60 = scalar_select %p57, %s58, %s59
    %p63 = pneg %p57
    %p64 = scmp.eq.s32.totalorder %s10, 7
    %p65 = por %p63, %p64
    %p66 = scmp.ne.s32.totalorder %s58, %s61
    %p67 = scmp.eq.s32.totalorder %s10, 0
    %p68 = por %p66, %p67
    %p69 = scmp.ne.s32.totalorder %s58, %s61
    %p70 = scmp.eq.s32.totalorder %s15, 7
    %p71 = por %p69, %p70
    %p72 = scmp.ne.s32.totalorder %s61, %s62
    %p73 = scmp.eq.s32.totalorder %s15, 0
    %p74 = por %p72, %p73
    %p75 = scmp.ne.s32.totalorder %s61, %s62
    %p76 = scmp.eq.s32.totalorder %s16, 7
    %p77 = por %p75, %p76
    %p79 = scmp.ne.s32.totalorder %s62, %s78
    %p80 = scmp.eq.s32.totalorder %s16, 0
    %p81 = por %p79, %p80
    %s82 = ssub.s32 %s18, %s25
    %p83 = scmp.eq.s32.totalorder %s82, 0
    %s85 = sadd.s32 %s84, 1
    %s86 = scalar_select %p83, %s84, %s85
    %p89 = pneg %p83
    %p90 = scmp.eq.s32.totalorder %s10, 7
    %p91 = por %p89, %p90
    %p92 = scmp.ne.s32.totalorder %s84, %s87
    %p93 = scmp.eq.s32.totalorder %s10, 0
    %p94 = por %p92, %p93
    %p95 = scmp.ne.s32.totalorder %s84, %s87
    %p96 = scmp.eq.s32.totalorder %s15, 7
    %p97 = por %p95, %p96
    %p98 = scmp.ne.s32.totalorder %s87, %s88
    %p99 = scmp.eq.s32.totalorder %s15, 0
    %p100 = por %p98, %p99
    %p101 = scmp.ne.s32.totalorder %s87, %s88
    %p102 = scmp.eq.s32.totalorder %s16, 7
    %p103 = por %p101, %p102
    %p105 = scmp.ne.s32.totalorder %s88, %s104
    %p106 = scmp.eq.s32.totalorder %s16, 0
    %p107 = por %p105, %p106
    %s108 = ssub.s32 %s18, %s25
    %p109 = scmp.eq.s32.totalorder %s108, 0
    %s111 = sadd.s32 %s110, 1
    %s112 = scalar_select %p109, %s110, %s111
    %p115 = pneg %p109
    %p116 = scmp.eq.s32.totalorder %s10, 7
    %p117 = por %p115, %p116
    %p118 = scmp.ne.s32.totalorder %s110, %s113
    %p119 = scmp.eq.s32.totalorder %s10, 0
    %p120 = por %p118, %p119
    %p121 = scmp.ne.s32.totalorder %s110, %s113
    %p122 = scmp.eq.s32.totalorder %s15, 7
    %p123 = por %p121, %p122
    %p124 = scmp.ne.s32.totalorder %s113, %s114
    %p125 = scmp.eq.s32.totalorder %s15, 0
    %p126 = por %p124, %p125
    %p127 = scmp.ne.s32.totalorder %s113, %s114
    %p128 = scmp.eq.s32.totalorder %s16, 7
    %p129 = por %p127, %p128
    %p131 = scmp.ne.s32.totalorder %s114, %s130
    %p132 = scmp.eq.s32.totalorder %s16, 0
    %p133 = por %p131, %p132
    %s134 = ssub.s32 %s17, %s29
    %s135 = ssub.s32 %s18, %s25
    %s136 = sor.u32 %s134, %s135
    %p137 = scmp.eq.s32.totalorder %s136, 0
    %s139 = sadd.s32 %s138, 1
    %s140 = scalar_select %p137, %s138, %s139
    %p143 = pneg %p137
    %p144 = scmp.eq.s32.totalorder %s10, 7
    %p145 = por %p143, %p144
    %p146 = scmp.ne.s32.totalorder %s138, %s141
    %p147 = scmp.eq.s32.totalorder %s10, 0
    %p148 = por %p146, %p147
    %p149 = scmp.ne.s32.totalorder %s138, %s141
    %p150 = scmp.eq.s32.totalorder %s15, 7
    %p151 = por %p149, %p150
    %p152 = scmp.ne.s32.totalorder %s141, %s142
    %p153 = scmp.eq.s32.totalorder %s15, 0
    %p154 = por %p152, %p153
    %p155 = scmp.ne.s32.totalorder %s141, %s142
    %p156 = scmp.eq.s32.totalorder %s16, 7
    %p157 = por %p155, %p156
    %p159 = scmp.ne.s32.totalorder %s142, %s158
    %p160 = scmp.eq.s32.totalorder %s16, 0
    %p161 = por %p159, %p160
    %p162 = scmp.le.s32.totalorder 1, %s10
    %p163 = scmp.lt.s32.totalorder %s10, 9
    %p164 = pnand %p162, %p163
    %p165 = pneg %p164
    // Predicated region
    $region9: #{stem_forward.1} parent=5 // pred_check
      _
    $region10: #{stem_forward.1} parent=5 // pred_check_branch
      %167 = sbr.rel (%p164) target = $region12
    $region11: #{stem_forward.1} parent=5 // pred_region
      %s168 = ssub.s32 %s10, 1
      // Predicated region
      $region13: #{stem_forward.1} parent=11 // pred_check
        %p169 = pneg %p74
      $region14: #{stem_forward.1} parent=11 // pred_check_branch
        %171 = sbr.rel (%p169) target = $region16
      $region15: #{stem_forward.1} parent=11 // pred_region
        %p172 = scmp.lt.s32.totalorder %s20, 0
        %s173 = scalar_select %p172, %s20, 0
        %s174 = smul.addr %s173, 4
        %s175 = scalar_lea.vmem %s1, %s174
      $region16: #{stem_forward.1} parent=11 // pred_fallthru
        _
      // Predicated region
      $region17: #{stem_forward.1} parent=11 // pred_check
        %p176 = pneg %p100
      $region18: #{stem_forward.1} parent=11 // pred_check_branch
        %178 = sbr.rel (%p176) target = $region20
      $region19: #{stem_forward.1} parent=11 // pred_region
        %p179 = scmp.lt.s32.totalorder %s20, 0
        %s180 = scalar_select %p179, %s20, 0
        %s181 = scalar_lea.vmem %s2, %s180
      $region20: #{stem_forward.1} parent=11 // pred_fallthru
        _
      // Predicated region
      $region21: #{stem_forward.1} parent=11 // pred_check
        %p182 = pneg %p126
      $region22: #{stem_forward.1} parent=11 // pred_check_branch
        %184 = sbr.rel (%p182) target = $region24
      $region23: #{stem_forward.1} parent=11 // pred_region
        %p185 = scmp.lt.s32.totalorder %s20, 0
        %s186 = scalar_select %p185, %s20, 0
        %s187 = scalar_lea.vmem %s3, %s186
      $region24: #{stem_forward.1} parent=11 // pred_fallthru
        _
    $region12: #{stem_forward.1} parent=5 // pred_fallthru
      _
    %p188 = scmp.lt.s32.totalorder %s10, 8
    // Predicated region
    $region25: #{stem_forward.1} parent=5 // pred_check
      %p189 = pneg %p188
    $region26: #{stem_forward.1} parent=5 // pred_check_branch
      %191 = sbr.rel (%p189) target = $region28
    $region27: #{stem_forward.1} parent=5 // pred_region
      // Predicated region
      $region29: #{stem_forward.1} parent=27 // pred_check
        %p192 = pneg %p42
      $region30: #{stem_forward.1} parent=27 // pred_check_branch
        %194 = sbr.rel (%p192) target = $region32
      $region31: #{stem_forward.1} parent=27 // pred_region
        %s195 = smul.u32 64, %s17
        %p196 = scmp.lt.s32.totalorder %s195, 511
        %s197 = scalar_select %p196, %s195, 511
        %s198 = smul.addr %s197, 2
        %s199 = smul.addr %s198, 4
        %s200 = scalar_lea.vmem %s0, %s199
        %s201 = smul.u32 64, %s17
      $region32: #{stem_forward.1} parent=27 // pred_fallthru
        _
    $region28: #{stem_forward.1} parent=5 // pred_fallthru
      _
    %p202 = scmp.le.s32.totalorder 1, %s10
    %p203 = scmp.lt.s32.totalorder %s10, 9
    %p204 = pnand %p202, %p203
    %p205 = pneg %p204
    // Predicated region
    $region33: #{stem_forward.1} parent=5 // pred_check
      _
    $region34: #{stem_forward.1} parent=5 // pred_check_branch
      %207 = sbr.rel (%p204) target = $region36
    $region35: #{stem_forward.1} parent=5 // pred_region
      %s208 = ssub.s32 %s10, 1
      %s209 = smul.u32 64, %s19
      %p210 = scmp.lt.s32.totalorder %s209, 511
      %s211 = scalar_select %p210, %s209, 511
      %s212 = smul.addr %s211, 2
      %s213 = smul.addr %s212, 4
      %s214 = scalar_lea.vmem %s0, %s213
      %p215 = pneg %p48
      %p216 = pneg %p45
      %p217 = scmp.lt.s32.totalorder %s20, 0
      %s218 = scalar_select %p217, %s20, 0
      %s219 = smul.addr %s218, 4
      %s220 = scalar_lea.vmem %s1, %s219
      %p221 = pneg %p74
      %p222 = pneg %p71
      %p223 = scmp.lt.s32.totalorder %s20, 0
      %s224 = scalar_select %p223, %s20, 0
      %s225 = scalar_lea.vmem %s2, %s224
      %p226 = pneg %p100
      %p227 = pneg %p97
      %p228 = scmp.lt.s32.totalorder %s20, 0
      %s229 = scalar_select %p228, %s20, 0
      %s230 = scalar_lea.vmem %s3, %s229
      %p231 = pneg %p126
      %p232 = pneg %p123
      %p233 = pneg %p154
      %p234 = pneg %p151
      %s235 = smul.u32 64, %s19
      %p236 = scmp.lt.s32.totalorder %s235, 511
      %s237 = scalar_select %p236, %s235, 511
      %p238 = scmp.lt.s32.totalorder %s20, 0
      %s239 = scalar_select %p238, %s20, 0
      %s240 = sadd.s32 %s239, %s237
      %s241 = smul.addr %s240, 4
      %s242 = scalar_lea.vmem %s4, %s241
      %s243 = smul.u32 64, %s19
      %p244 = scmp.lt.s32.totalorder %s243, 511
      %s245 = scalar_select %p244, %s243, 511
      %s246 = smul.addr %s245, 2
      %s247 = smul.addr %s246, 4
      %s248 = scalar_lea.vmem %s0, %s247
      %s249 = smul.u32 64, %s19
      %p250 = scmp.lt.s32.totalorder %s20, 0
      %s251 = scalar_select %p250, %s20, 0
      %s252 = smul.addr %s251, 4
      %s253 = scalar_lea.vmem %s1, %s252
      %p254 = scmp.lt.s32.totalorder %s20, 0
      %s255 = scalar_select %p254, %s20, 0
      %s256 = scalar_lea.vmem %s2, %s255
      %p257 = scmp.lt.s32.totalorder %s20, 0
      %s258 = scalar_select %p257, %s20, 0
      %s259 = scalar_lea.vmem %s3, %s258
      %s260 = smul.u32 64, %s19
      %p261 = scmp.lt.s32.totalorder %s260, 511
      %s262 = scalar_select %p261, %s260, 511
      %p263 = scmp.lt.s32.totalorder %s20, 0
      %s264 = scalar_select %p263, %s20, 0
      %s265 = sadd.s32 %s264, %s262
      %s266 = smul.addr %s265, 4
      %s267 = scalar_lea.vmem %s4, %s266
      %s268 = smul.u32 64, %s19
      %v269 = vld [vmem:[%s248] sm:$0xff]
      %v270 = vld [vmem:[%s248 + $0x8] sm:$0xff]
      %v271 = vld [vmem:[%s248 + $0x10] sm:$0xff]
      %v272 = vld [vmem:[%s248 + $0x18] sm:$0xff]
      %v273 = vld [vmem:[%s248 + $0x20] sm:$0xff]
      %v274 = vld [vmem:[%s248 + $0x28] sm:$0xff]
      %v275 = vld [vmem:[%s248 + $0x30] sm:$0xff]
      %v276 = vld [vmem:[%s248 + $0x38] sm:$0xff]
      %v277 = vld [vmem:[%s248 + $0x40] sm:$0xff]
      %v278 = vld [vmem:[%s248 + $0x48] sm:$0xff]
      %v279 = vld [vmem:[%s248 + $0x50] sm:$0xff]
      %v280 = vld [vmem:[%s248 + $0x58] sm:$0xff]
      %v281 = vld [vmem:[%s248 + $0x60] sm:$0xff]
      %v282 = vld [vmem:[%s248 + $0x68] sm:$0xff]
      %v283 = vld [vmem:[%s248 + $0x70] sm:$0xff]
      %v284 = vld [vmem:[%s248 + $0x78] sm:$0xff]
      %v285 = vld [vmem:[%s248 + $0x80] sm:$0xff]
      %v286 = vld [vmem:[%s248 + $0x88] sm:$0xff]
      %v287 = vld [vmem:[%s248 + $0x90] sm:$0xff]
      %v288 = vld [vmem:[%s248 + $0x98] sm:$0xff]
      %v289 = vld [vmem:[%s248 + $0xa0] sm:$0xff]
      %v290 = vld [vmem:[%s248 + $0xa8] sm:$0xff]
      %v291 = vld [vmem:[%s248 + $0xb0] sm:$0xff]
      %v292 = vld [vmem:[%s248 + $0xb8] sm:$0xff]
      %v293 = vld [vmem:[%s248 + $0xc0] sm:$0xff]
      %v294 = vld [vmem:[%s248 + $0xc8] sm:$0xff]
      %v295 = vld [vmem:[%s248 + $0xd0] sm:$0xff]
      %v296 = vld [vmem:[%s248 + $0xd8] sm:$0xff]
      %v297 = vld [vmem:[%s248 + $0xe0] sm:$0xff]
      %v298 = vld [vmem:[%s248 + $0xe8] sm:$0xff]
      %v299 = vld [vmem:[%s248 + $0xf0] sm:$0xff]
      %v300 = vld [vmem:[%s248 + $0xf8] sm:$0xff]
      %v301 = vld [vmem:[%s248 + $0x100] sm:$0xff]
      %v302 = vld [vmem:[%s248 + $0x108] sm:$0xff]
      %v303 = vld [vmem:[%s248 + $0x110] sm:$0xff]
      %v304 = vld [vmem:[%s248 + $0x118] sm:$0xff]
      %v305 = vld [vmem:[%s248 + $0x120] sm:$0xff]
      %v306 = vld [vmem:[%s248 + $0x128] sm:$0xff]
      %v307 = vld [vmem:[%s248 + $0x130] sm:$0xff]
      %v308 = vld [vmem:[%s248 + $0x138] sm:$0xff]
      %v309 = vld [vmem:[%s248 + $0x140] sm:$0xff]
      %v310 = vld [vmem:[%s248 + $0x148] sm:$0xff]
      %v311 = vld [vmem:[%s248 + $0x150] sm:$0xff]
      %v312 = vld [vmem:[%s248 + $0x158] sm:$0xff]
      %v313 = vld [vmem:[%s248 + $0x160] sm:$0xff]
      %v314 = vld [vmem:[%s248 + $0x168] sm:$0xff]
      %v315 = vld [vmem:[%s248 + $0x170] sm:$0xff]
      %v316 = vld [vmem:[%s248 + $0x178] sm:$0xff]
      %v317 = vld [vmem:[%s248 + $0x180] sm:$0xff]
      %v318 = vld [vmem:[%s248 + $0x188] sm:$0xff]
      %v319 = vld [vmem:[%s248 + $0x190] sm:$0xff]
      %v320 = vld [vmem:[%s248 + $0x198] sm:$0xff]
      %v321 = vld [vmem:[%s248 + $0x1a0] sm:$0xff]
      %v322 = vld [vmem:[%s248 + $0x1a8] sm:$0xff]
      %v323 = vld [vmem:[%s248 + $0x1b0] sm:$0xff]
      %v324 = vld [vmem:[%s248 + $0x1b8] sm:$0xff]
      %v325 = vld [vmem:[%s248 + $0x1c0] sm:$0xff]
      %v326 = vld [vmem:[%s248 + $0x1c8] sm:$0xff]
      %v327 = vld [vmem:[%s248 + $0x1d0] sm:$0xff]
      %v328 = vld [vmem:[%s248 + $0x1d8] sm:$0xff]
      %v329 = vld [vmem:[%s248 + $0x1e0] sm:$0xff]
      %v330 = vld [vmem:[%s248 + $0x1e8] sm:$0xff]
      %v331 = vld [vmem:[%s248 + $0x1f0] sm:$0xff]
      %v332 = vld [vmem:[%s248 + $0x1f8] sm:$0xff]
      %v333 = vld [vmem:[%s253] sm:$0xf]
      %v334 = vld [vmem:[%s253 + $0x4] sm:$0xf]
      %v335 = vld [vmem:[%s253 + $0x8] sm:$0xf]
      %v336 = vld [vmem:[%s253 + $0xc] sm:$0xf]
      %v337 = vld [vmem:[%s253 + $0x10] sm:$0xf]
      %v338 = vld [vmem:[%s253 + $0x14] sm:$0xf]
      %v339 = vld [vmem:[%s253 + $0x18] sm:$0xf]
      %v340 = vld [vmem:[%s253 + $0x1c] sm:$0xf]
      %v341 = vld [vmem:[%s253 + $0x20] sm:$0xf]
      %v342 = vld [vmem:[%s253 + $0x24] sm:$0xf]
      %v343 = vld [vmem:[%s253 + $0x28] sm:$0xf]
      %v344 = vld [vmem:[%s253 + $0x2c] sm:$0xf]
      %v345 = vld [vmem:[%s253 + $0x30] sm:$0xf]
      %v346 = vld [vmem:[%s253 + $0x34] sm:$0xf]
      %v347 = vld [vmem:[%s253 + $0x38] sm:$0xf]
      %v348 = vld [vmem:[%s253 + $0x3c] sm:$0xf]
      %v349 = vld [vmem:[%s253 + $0x40] sm:$0xf]
      %v350 = vld [vmem:[%s253 + $0x44] sm:$0xf]
      %v351 = vld [vmem:[%s253 + $0x48] sm:$0xf]
      %v352 = vld [vmem:[%s253 + $0x4c] sm:$0xf]
      %v353 = vld [vmem:[%s253 + $0x50] sm:$0xf]
      %v354 = vld [vmem:[%s253 + $0x54] sm:$0xf]
      %v355 = vld [vmem:[%s253 + $0x58] sm:$0xf]
      %v356 = vld [vmem:[%s253 + $0x5c] sm:$0xf]
      %v357 = vld [vmem:[%s253 + $0x60] sm:$0xf]
      %v358 = vld [vmem:[%s253 + $0x64] sm:$0xf]
      %v359 = vld [vmem:[%s253 + $0x68] sm:$0xf]
      %v360 = vld [vmem:[%s253 + $0x6c] sm:$0xf]
      %v361 = vld [vmem:[%s253 + $0x70] sm:$0xf]
      %v362 = vld [vmem:[%s253 + $0x74] sm:$0xf]
      %v363 = vld [vmem:[%s253 + $0x78] sm:$0xf]
      %v364 = vld [vmem:[%s253 + $0x7c] sm:$0xf]
      %v429 = vunpack.c.l.b16 %v269
      %v430 = vunpack.c.h.b16 %v269
      %v431 = vunpack.c.l.b16 %v270
      %v432 = vunpack.c.h.b16 %v270
      %v433 = vunpack.c.l.b16 %v271
      %v434 = vunpack.c.h.b16 %v271
      %v435 = vunpack.c.l.b16 %v272
      %v436 = vunpack.c.h.b16 %v272
      %v437 = vunpack.c.l.b16 %v273
      %v438 = vunpack.c.h.b16 %v273
      %v439 = vunpack.c.l.b16 %v274
      %v440 = vunpack.c.h.b16 %v274
      %v441 = vunpack.c.l.b16 %v275
      %v442 = vunpack.c.h.b16 %v275
      %v443 = vunpack.c.l.b16 %v276
      %v444 = vunpack.c.h.b16 %v276
      %v445 = vunpack.c.l.b16 %v277
      %v446 = vunpack.c.h.b16 %v277
      %v447 = vunpack.c.l.b16 %v278
      %v448 = vunpack.c.h.b16 %v278
      %v449 = vunpack.c.l.b16 %v279
      %v450 = vunpack.c.h.b16 %v279
      %v451 = vunpack.c.l.b16 %v280
      %v452 = vunpack.c.h.b16 %v280
      %v453 = vunpack.c.l.b16 %v281
      %v454 = vunpack.c.h.b16 %v281
      %v455 = vunpack.c.l.b16 %v282
      %v456 = vunpack.c.h.b16 %v282
      %v457 = vunpack.c.l.b16 %v283
      %v458 = vunpack.c.h.b16 %v283
      %v459 = vunpack.c.l.b16 %v284
      %v460 = vunpack.c.h.b16 %v284
      %v461 = vunpack.c.l.b16 %v285
      %v462 = vunpack.c.h.b16 %v285
      %v463 = vunpack.c.l.b16 %v286
      %v464 = vunpack.c.h.b16 %v286
      %v465 = vunpack.c.l.b16 %v287
      %v466 = vunpack.c.h.b16 %v287
      %v467 = vunpack.c.l.b16 %v288
      %v468 = vunpack.c.h.b16 %v288
      %v469 = vunpack.c.l.b16 %v289
      %v470 = vunpack.c.h.b16 %v289
      %v471 = vunpack.c.l.b16 %v290
      %v472 = vunpack.c.h.b16 %v290
      %v473 = vunpack.c.l.b16 %v291
      %v474 = vunpack.c.h.b16 %v291
      %v475 = vunpack.c.l.b16 %v292
      %v476 = vunpack.c.h.b16 %v292
      %v477 = vunpack.c.l.b16 %v293
      %v478 = vunpack.c.h.b16 %v293
      %v479 = vunpack.c.l.b16 %v294
      %v480 = vunpack.c.h.b16 %v294
      %v481 = vunpack.c.l.b16 %v295
      %v482 = vunpack.c.h.b16 %v295
      %v483 = vunpack.c.l.b16 %v296
      %v484 = vunpack.c.h.b16 %v296
      %v485 = vunpack.c.l.b16 %v297
      %v486 = vunpack.c.h.b16 %v297
      %v487 = vunpack.c.l.b16 %v298
      %v488 = vunpack.c.h.b16 %v298
      %v489 = vunpack.c.l.b16 %v299
      %v490 = vunpack.c.h.b16 %v299
      %v491 = vunpack.c.l.b16 %v300
      %v492 = vunpack.c.h.b16 %v300
      %v493 = vunpack.c.l.b16 %v301
      %v494 = vunpack.c.h.b16 %v301
      %v495 = vunpack.c.l.b16 %v302
      %v496 = vunpack.c.h.b16 %v302
      %v497 = vunpack.c.l.b16 %v303
      %v498 = vunpack.c.h.b16 %v303
      %v499 = vunpack.c.l.b16 %v304
      %v500 = vunpack.c.h.b16 %v304
      %v501 = vunpack.c.l.b16 %v305
      %v502 = vunpack.c.h.b16 %v305
      %v503 = vunpack.c.l.b16 %v306
      %v504 = vunpack.c.h.b16 %v306
      %v505 = vunpack.c.l.b16 %v307
      %v506 = vunpack.c.h.b16 %v307
      %v507 = vunpack.c.l.b16 %v308
      %v508 = vunpack.c.h.b16 %v308
      %v509 = vunpack.c.l.b16 %v309
      %v510 = vunpack.c.h.b16 %v309
      %v511 = vunpack.c.l.b16 %v310
      %v512 = vunpack.c.h.b16 %v310
      %v513 = vunpack.c.l.b16 %v311
      %v514 = vunpack.c.h.b16 %v311
      %v515 = vunpack.c.l.b16 %v312
      %v516 = vunpack.c.h.b16 %v312
      %v517 = vunpack.c.l.b16 %v313
      %v518 = vunpack.c.h.b16 %v313
      %v519 = vunpack.c.l.b16 %v314
      %v520 = vunpack.c.h.b16 %v314
      %v521 = vunpack.c.l.b16 %v315
      %v522 = vunpack.c.h.b16 %v315
      %v523 = vunpack.c.l.b16 %v316
      %v524 = vunpack.c.h.b16 %v316
      %v525 = vunpack.c.l.b16 %v317
      %v526 = vunpack.c.h.b16 %v317
      %v527 = vunpack.c.l.b16 %v318
      %v528 = vunpack.c.h.b16 %v318
      %v529 = vunpack.c.l.b16 %v319
      %v530 = vunpack.c.h.b16 %v319
      %v531 = vunpack.c.l.b16 %v320
      %v532 = vunpack.c.h.b16 %v320
      %v533 = vunpack.c.l.b16 %v321
      %v534 = vunpack.c.h.b16 %v321
      %v535 = vunpack.c.l.b16 %v322
      %v536 = vunpack.c.h.b16 %v322
      %v537 = vunpack.c.l.b16 %v323
      %v538 = vunpack.c.h.b16 %v323
      %v539 = vunpack.c.l.b16 %v324
      %v540 = vunpack.c.h.b16 %v324
      %v541 = vunpack.c.l.b16 %v325
      %v542 = vunpack.c.h.b16 %v325
      %v543 = vunpack.c.l.b16 %v326
      %v544 = vunpack.c.h.b16 %v326
      %v545 = vunpack.c.l.b16 %v327
      %v546 = vunpack.c.h.b16 %v327
      %v547 = vunpack.c.l.b16 %v328
      %v548 = vunpack.c.h.b16 %v328
      %v549 = vunpack.c.l.b16 %v329
      %v550 = vunpack.c.h.b16 %v329
      %v551 = vunpack.c.l.b16 %v330
      %v552 = vunpack.c.h.b16 %v330
      %v553 = vunpack.c.l.b16 %v331
      %v554 = vunpack.c.h.b16 %v331
      %v555 = vunpack.c.l.b16 %v332
      %v556 = vunpack.c.h.b16 %v332
      %v557 = vpack.c.b16 %v431, %v429
      %v558 = vpack.c.b16 %v432, %v430
      %v559 = vpack.c.b16 %v435, %v433
      %v560 = vpack.c.b16 %v436, %v434
      %v561 = vpack.c.b16 %v439, %v437
      %v562 = vpack.c.b16 %v440, %v438
      %v563 = vpack.c.b16 %v443, %v441
      %v564 = vpack.c.b16 %v444, %v442
      %v565 = vpack.c.b16 %v447, %v445
      %v566 = vpack.c.b16 %v448, %v446
      %v567 = vpack.c.b16 %v451, %v449
      %v568 = vpack.c.b16 %v452, %v450
      %v569 = vpack.c.b16 %v455, %v453
      %v570 = vpack.c.b16 %v456, %v454
      %v571 = vpack.c.b16 %v459, %v457
      %v572 = vpack.c.b16 %v460, %v458
      %v573 = vpack.c.b16 %v463, %v461
      %v574 = vpack.c.b16 %v464, %v462
      %v575 = vpack.c.b16 %v467, %v465
      %v576 = vpack.c.b16 %v468, %v466
      %v577 = vpack.c.b16 %v471, %v469
      %v578 = vpack.c.b16 %v472, %v470
      %v579 = vpack.c.b16 %v475, %v473
      %v580 = vpack.c.b16 %v476, %v474
      %v581 = vpack.c.b16 %v479, %v477
      %v582 = vpack.c.b16 %v480, %v478
      %v583 = vpack.c.b16 %v483, %v481
      %v584 = vpack.c.b16 %v484, %v482
      %v585 = vpack.c.b16 %v487, %v485
      %v586 = vpack.c.b16 %v488, %v486
      %v587 = vpack.c.b16 %v491, %v489
      %v588 = vpack.c.b16 %v492, %v490
      %v589 = vpack.c.b16 %v495, %v493
      %v590 = vpack.c.b16 %v496, %v494
      %v591 = vpack.c.b16 %v499, %v497
      %v592 = vpack.c.b16 %v500, %v498
      %v593 = vpack.c.b16 %v503, %v501
      %v594 = vpack.c.b16 %v504, %v502
      %v595 = vpack.c.b16 %v507, %v505
      %v596 = vpack.c.b16 %v508, %v506
      %v597 = vpack.c.b16 %v511, %v509
      %v598 = vpack.c.b16 %v512, %v510
      %v599 = vpack.c.b16 %v515, %v513
      %v600 = vpack.c.b16 %v516, %v514
      %v601 = vpack.c.b16 %v519, %v517
      %v602 = vpack.c.b16 %v520, %v518
      %v603 = vpack.c.b16 %v523, %v521
      %v604 = vpack.c.b16 %v524, %v522
      %v605 = vpack.c.b16 %v527, %v525
      %v606 = vpack.c.b16 %v528, %v526
      %v607 = vpack.c.b16 %v531, %v529
      %v608 = vpack.c.b16 %v532, %v530
      %v609 = vpack.c.b16 %v535, %v533
      %v610 = vpack.c.b16 %v536, %v534
      %v611 = vpack.c.b16 %v539, %v537
      %v612 = vpack.c.b16 %v540, %v538
      %v613 = vpack.c.b16 %v543, %v541
      %v614 = vpack.c.b16 %v544, %v542
      %v615 = vpack.c.b16 %v547, %v545
      %v616 = vpack.c.b16 %v548, %v546
      %v617 = vpack.c.b16 %v551, %v549
      %v618 = vpack.c.b16 %v552, %v550
      %v619 = vpack.c.b16 %v555, %v553
      %v620 = vpack.c.b16 %v556, %v554
      %v717 = vunpack.c.l.b16 %v333
      %v718 = vunpack.c.l.b16 %v334
      %v719 = vunpack.c.l.b16 %v335
      %v720 = vunpack.c.l.b16 %v336
      %v721 = vunpack.c.l.b16 %v337
      %v722 = vunpack.c.l.b16 %v338
      %v723 = vunpack.c.l.b16 %v339
      %v724 = vunpack.c.l.b16 %v340
      %v725 = vunpack.c.l.b16 %v341
      %v726 = vunpack.c.l.b16 %v342
      %v727 = vunpack.c.l.b16 %v343
      %v728 = vunpack.c.l.b16 %v344
      %v729 = vunpack.c.l.b16 %v345
      %v730 = vunpack.c.l.b16 %v346
      %v731 = vunpack.c.l.b16 %v347
      %v732 = vunpack.c.l.b16 %v348
      %v733 = vunpack.c.l.b16 %v349
      %v734 = vunpack.c.l.b16 %v350
      %v735 = vunpack.c.l.b16 %v351
      %v736 = vunpack.c.l.b16 %v352
      %v737 = vunpack.c.l.b16 %v353
      %v738 = vunpack.c.l.b16 %v354
      %v739 = vunpack.c.l.b16 %v355
      %v740 = vunpack.c.l.b16 %v356
      %v741 = vunpack.c.l.b16 %v357
      %v742 = vunpack.c.l.b16 %v358
      %v743 = vunpack.c.l.b16 %v359
      %v744 = vunpack.c.l.b16 %v360
      %v745 = vunpack.c.l.b16 %v361
      %v746 = vunpack.c.l.b16 %v362
      %v747 = vunpack.c.l.b16 %v363
      %v748 = vunpack.c.l.b16 %v364
      %v749 = vpack.c.b16 %v718, %v717
      %v750 = vpack.c.b16 %v720, %v719
      %v751 = vpack.c.b16 %v722, %v721
      %v752 = vpack.c.b16 %v724, %v723
      %v753 = vpack.c.b16 %v726, %v725
      %v754 = vpack.c.b16 %v728, %v727
      %v755 = vpack.c.b16 %v730, %v729
      %v756 = vpack.c.b16 %v732, %v731
      %v757 = vpack.c.b16 %v734, %v733
      %v758 = vpack.c.b16 %v736, %v735
      %v759 = vpack.c.b16 %v738, %v737
      %v760 = vpack.c.b16 %v740, %v739
      %v761 = vpack.c.b16 %v742, %v741
      %v762 = vpack.c.b16 %v744, %v743
      %v763 = vpack.c.b16 %v746, %v745
      %v764 = vpack.c.b16 %v748, %v747
      %781 = vmatpush.bf16.msra.mxu0 %v756
      %782 = vmatpush.bf16.msra.mxu0 %v755
      %783 = vmatpush.bf16.msra.mxu0 %v754
      %784 = vmatpush.bf16.msra.mxu0 %v753
      %785 = vmatpush.bf16.msra.mxu0 %v752
      %786 = vmatpush.bf16.msra.mxu0 %v751
      %787 = vmatpush.bf16.msra.mxu0 %v750
      %788 = vmatpush.bf16.msra.mxu0 %v749
      %789 = vmatmul.bf16.gmra.mxu0 %v557
      %v790 = vpop.f32.mrf.mxu0
      %v791 = vadd.f32 0.0, %v790
      %v792 = vpop.f32.mrf.mxu0
      %v793 = vadd.f32 0.0, %v792
      %794 = vmatmul.bf16.gmra.mxu0 %v559
      %v795 = vpop.f32.mrf.mxu0
      %v796 = vadd.f32 0.0, %v795
      %v797 = vpop.f32.mrf.mxu0
      %v798 = vadd.f32 0.0, %v797
      %799 = vmatmul.bf16.gmra.mxu0 %v561
      %v800 = vpop.f32.mrf.mxu0
      %v801 = vadd.f32 0.0, %v800
      %v802 = vpop.f32.mrf.mxu0
      %v803 = vadd.f32 0.0, %v802
      %804 = vmatmul.bf16.gmra.mxu0 %v563
      %v805 = vpop.f32.mrf.mxu0
      %v806 = vadd.f32 0.0, %v805
      %v807 = vpop.f32.mrf.mxu0
      %v808 = vadd.f32 0.0, %v807
      %809 = vmatmul.bf16.gmra.mxu0 %v565
      %v810 = vpop.f32.mrf.mxu0
      %v811 = vadd.f32 0.0, %v810
      %v812 = vpop.f32.mrf.mxu0
      %v813 = vadd.f32 0.0, %v812
      %814 = vmatmul.bf16.gmra.mxu0 %v567
      %v815 = vpop.f32.mrf.mxu0
      %v816 = vadd.f32 0.0, %v815
      %v817 = vpop.f32.mrf.mxu0
      %v818 = vadd.f32 0.0, %v817
      %819 = vmatmul.bf16.gmra.mxu0 %v569
      %v820 = vpop.f32.mrf.mxu0
      %v821 = vadd.f32 0.0, %v820
      %v822 = vpop.f32.mrf.mxu0
      %v823 = vadd.f32 0.0, %v822
      %824 = vmatmul.bf16.gmra.mxu0 %v571
      %v825 = vpop.f32.mrf.mxu0
      %v826 = vadd.f32 0.0, %v825
      %v827 = vpop.f32.mrf.mxu0
      %v828 = vadd.f32 0.0, %v827
      %829 = vmatmul.bf16.gmra.mxu0 %v573
      %v830 = vpop.f32.mrf.mxu0
      %v831 = vadd.f32 0.0, %v830
      %v832 = vpop.f32.mrf.mxu0
      %v833 = vadd.f32 0.0, %v832
      %834 = vmatmul.bf16.gmra.mxu0 %v575
      %v835 = vpop.f32.mrf.mxu0
      %v836 = vadd.f32 0.0, %v835
      %v837 = vpop.f32.mrf.mxu0
      %v838 = vadd.f32 0.0, %v837
      %839 = vmatmul.bf16.gmra.mxu0 %v577
      %v840 = vpop.f32.mrf.mxu0
      %v841 = vadd.f32 0.0, %v840
      %v842 = vpop.f32.mrf.mxu0
      %v843 = vadd.f32 0.0, %v842
      %844 = vmatmul.bf16.gmra.mxu0 %v579
      %v845 = vpop.f32.mrf.mxu0
      %v846 = vadd.f32 0.0, %v845
      %v847 = vpop.f32.mrf.mxu0
      %v848 = vadd.f32 0.0, %v847
      %849 = vmatmul.bf16.gmra.mxu0 %v581
      %v850 = vpop.f32.mrf.mxu0
      %v851 = vadd.f32 0.0, %v850
      %v852 = vpop.f32.mrf.mxu0
      %v853 = vadd.f32 0.0, %v852
      %854 = vmatmul.bf16.gmra.mxu0 %v583
      %v855 = vpop.f32.mrf.mxu0
      %v856 = vadd.f32 0.0, %v855
      %v857 = vpop.f32.mrf.mxu0
      %v858 = vadd.f32 0.0, %v857
      %859 = vmatmul.bf16.gmra.mxu0 %v585
      %v860 = vpop.f32.mrf.mxu0
      %v861 = vadd.f32 0.0, %v860
      %v862 = vpop.f32.mrf.mxu0
      %v863 = vadd.f32 0.0, %v862
      %864 = vmatmul.bf16.gmra.mxu0 %v587
      %v865 = vpop.f32.mrf.mxu0
      %v866 = vadd.f32 0.0, %v865
      %v867 = vpop.f32.mrf.mxu0
      %v868 = vadd.f32 0.0, %v867
      %869 = vmatmul.bf16.gmra.mxu0 %v589
      %v870 = vpop.f32.mrf.mxu0
      %v871 = vadd.f32 0.0, %v870
      %v872 = vpop.f32.mrf.mxu0
      %v873 = vadd.f32 0.0, %v872
      %874 = vmatmul.bf16.gmra.mxu0 %v591
      %v875 = vpop.f32.mrf.mxu0
      %v876 = vadd.f32 0.0, %v875
      %v877 = vpop.f32.mrf.mxu0
      %v878 = vadd.f32 0.0, %v877
      %879 = vmatmul.bf16.gmra.mxu0 %v593
      %v880 = vpop.f32.mrf.mxu0
      %v881 = vadd.f32 0.0, %v880
      %v882 = vpop.f32.mrf.mxu0
      %v883 = vadd.f32 0.0, %v882
      %884 = vmatmul.bf16.gmra.mxu0 %v595
      %v885 = vpop.f32.mrf.mxu0
      %v886 = vadd.f32 0.0, %v885
      %v887 = vpop.f32.mrf.mxu0
      %v888 = vadd.f32 0.0, %v887
      %889 = vmatmul.bf16.gmra.mxu0 %v597
      %v890 = vpop.f32.mrf.mxu0
      %v891 = vadd.f32 0.0, %v890
      %v892 = vpop.f32.mrf.mxu0
      %v893 = vadd.f32 0.0, %v892
      %894 = vmatmul.bf16.gmra.mxu0 %v599
      %v895 = vpop.f32.mrf.mxu0
      %v896 = vadd.f32 0.0, %v895
      %v897 = vpop.f32.mrf.mxu0
      %v898 = vadd.f32 0.0, %v897
      %899 = vmatmul.bf16.gmra.mxu0 %v601
      %v900 = vpop.f32.mrf.mxu0
      %v901 = vadd.f32 0.0, %v900
      %v902 = vpop.f32.mrf.mxu0
      %v903 = vadd.f32 0.0, %v902
      %904 = vmatmul.bf16.gmra.mxu0 %v603
      %v905 = vpop.f32.mrf.mxu0
      %v906 = vadd.f32 0.0, %v905
      %v907 = vpop.f32.mrf.mxu0
      %v908 = vadd.f32 0.0, %v907
      %909 = vmatmul.bf16.gmra.mxu0 %v605
      %v910 = vpop.f32.mrf.mxu0
      %v911 = vadd.f32 0.0, %v910
      %v912 = vpop.f32.mrf.mxu0
      %v913 = vadd.f32 0.0, %v912
      %914 = vmatmul.bf16.gmra.mxu0 %v607
      %v915 = vpop.f32.mrf.mxu0
      %v916 = vadd.f32 0.0, %v915
      %v917 = vpop.f32.mrf.mxu0
      %v918 = vadd.f32 0.0, %v917
      %919 = vmatmul.bf16.gmra.mxu0 %v609
      %v920 = vpop.f32.mrf.mxu0
      %v921 = vadd.f32 0.0, %v920
      %v922 = vpop.f32.mrf.mxu0
      %v923 = vadd.f32 0.0, %v922
      %924 = vmatmul.bf16.gmra.mxu0 %v611
      %v925 = vpop.f32.mrf.mxu0
      %v926 = vadd.f32 0.0, %v925
      %v927 = vpop.f32.mrf.mxu0
      %v928 = vadd.f32 0.0, %v927
      %929 = vmatmul.bf16.gmra.mxu0 %v613
      %v930 = vpop.f32.mrf.mxu0
      %v931 = vadd.f32 0.0, %v930
      %v932 = vpop.f32.mrf.mxu0
      %v933 = vadd.f32 0.0, %v932
      %934 = vmatmul.bf16.gmra.mxu0 %v615
      %v935 = vpop.f32.mrf.mxu0
      %v936 = vadd.f32 0.0, %v935
      %v937 = vpop.f32.mrf.mxu0
      %v938 = vadd.f32 0.0, %v937
      %939 = vmatmul.bf16.gmra.mxu0 %v617
      %v940 = vpop.f32.mrf.mxu0
      %v941 = vadd.f32 0.0, %v940
      %v942 = vpop.f32.mrf.mxu0
      %v943 = vadd.f32 0.0, %v942
      %944 = vmatmul.bf16.gmra.mxu0 %v619
      %v945 = vpop.f32.mrf.mxu0
      %v946 = vadd.f32 0.0, %v945
      %v947 = vpop.f32.mrf.mxu0
      %v948 = vadd.f32 0.0, %v947
      %949 = vdwg.mxu0
      %950 = vmatpush.bf16.msra.mxu0 %v764
      %951 = vmatpush.bf16.msra.mxu0 %v763
      %952 = vmatpush.bf16.msra.mxu0 %v762
      %953 = vmatpush.bf16.msra.mxu0 %v761
      %954 = vmatpush.bf16.msra.mxu0 %v760
      %955 = vmatpush.bf16.msra.mxu0 %v759
      %956 = vmatpush.bf16.msra.mxu0 %v758
      %957 = vmatpush.bf16.msra.mxu0 %v757
      %958 = vmatmul.bf16.gmra.mxu0 %v558
      %v959 = vpop.f32.mrf.mxu0
      %v960 = vadd.f32 %v791, %v959
      %v961 = vpop.f32.mrf.mxu0
      %v962 = vadd.f32 %v793, %v961
      %963 = vmatmul.bf16.gmra.mxu0 %v560
      %v964 = vpop.f32.mrf.mxu0
      %v965 = vadd.f32 %v796, %v964
      %v966 = vpop.f32.mrf.mxu0
      %v967 = vadd.f32 %v798, %v966
      %968 = vmatmul.bf16.gmra.mxu0 %v562
      %v969 = vpop.f32.mrf.mxu0
      %v970 = vadd.f32 %v801, %v969
      %v971 = vpop.f32.mrf.mxu0
      %v972 = vadd.f32 %v803, %v971
      %973 = vmatmul.bf16.gmra.mxu0 %v564
      %v974 = vpop.f32.mrf.mxu0
      %v975 = vadd.f32 %v806, %v974
      %v976 = vpop.f32.mrf.mxu0
      %v977 = vadd.f32 %v808, %v976
      %978 = vmatmul.bf16.gmra.mxu0 %v566
      %v979 = vpop.f32.mrf.mxu0
      %v980 = vadd.f32 %v811, %v979
      %v981 = vpop.f32.mrf.mxu0
      %v982 = vadd.f32 %v813, %v981
      %983 = vmatmul.bf16.gmra.mxu0 %v568
      %v984 = vpop.f32.mrf.mxu0
      %v985 = vadd.f32 %v816, %v984
      %v986 = vpop.f32.mrf.mxu0
      %v987 = vadd.f32 %v818, %v986
      %988 = vmatmul.bf16.gmra.mxu0 %v570
      %v989 = vpop.f32.mrf.mxu0
      %v990 = vadd.f32 %v821, %v989
      %v991 = vpop.f32.mrf.mxu0
      %v992 = vadd.f32 %v823, %v991
      %993 = vmatmul.bf16.gmra.mxu0 %v572
      %v994 = vpop.f32.mrf.mxu0
      %v995 = vadd.f32 %v826, %v994
      %v996 = vpop.f32.mrf.mxu0
      %v997 = vadd.f32 %v828, %v996
      %998 = vmatmul.bf16.gmra.mxu0 %v574
      %v999 = vpop.f32.mrf.mxu0
      %v1000 = vadd.f32 %v831, %v999
      %v1001 = vpop.f32.mrf.mxu0
      %v1002 = vadd.f32 %v833, %v1001
      %1003 = vmatmul.bf16.gmra.mxu0 %v576
      %v1004 = vpop.f32.mrf.mxu0
      %v1005 = vadd.f32 %v836, %v1004
      %v1006 = vpop.f32.mrf.mxu0
      %v1007 = vadd.f32 %v838, %v1006
      %1008 = vmatmul.bf16.gmra.mxu0 %v578
      %v1009 = vpop.f32.mrf.mxu0
      %v1010 = vadd.f32 %v841, %v1009
      %v1011 = vpop.f32.mrf.mxu0
      %v1012 = vadd.f32 %v843, %v1011
      %1013 = vmatmul.bf16.gmra.mxu0 %v580
      %v1014 = vpop.f32.mrf.mxu0
      %v1015 = vadd.f32 %v846, %v1014
      %v1016 = vpop.f32.mrf.mxu0
      %v1017 = vadd.f32 %v848, %v1016
      %1018 = vmatmul.bf16.gmra.mxu0 %v582
      %v1019 = vpop.f32.mrf.mxu0
      %v1020 = vadd.f32 %v851, %v1019
      %v1021 = vpop.f32.mrf.mxu0
      %v1022 = vadd.f32 %v853, %v1021
      %1023 = vmatmul.bf16.gmra.mxu0 %v584
      %v1024 = vpop.f32.mrf.mxu0
      %v1025 = vadd.f32 %v856, %v1024
      %v1026 = vpop.f32.mrf.mxu0
      %v1027 = vadd.f32 %v858, %v1026
      %1028 = vmatmul.bf16.gmra.mxu0 %v586
      %v1029 = vpop.f32.mrf.mxu0
      %v1030 = vadd.f32 %v861, %v1029
      %v1031 = vpop.f32.mrf.mxu0
      %v1032 = vadd.f32 %v863, %v1031
      %1033 = vmatmul.bf16.gmra.mxu0 %v588
      %v1034 = vpop.f32.mrf.mxu0
      %v1035 = vadd.f32 %v866, %v1034
      %v1036 = vpop.f32.mrf.mxu0
      %v1037 = vadd.f32 %v868, %v1036
      %1038 = vmatmul.bf16.gmra.mxu0 %v590
      %v1039 = vpop.f32.mrf.mxu0
      %v1040 = vadd.f32 %v871, %v1039
      %v1041 = vpop.f32.mrf.mxu0
      %v1042 = vadd.f32 %v873, %v1041
      %1043 = vmatmul.bf16.gmra.mxu0 %v592
      %v1044 = vpop.f32.mrf.mxu0
      %v1045 = vadd.f32 %v876, %v1044
      %v1046 = vpop.f32.mrf.mxu0
      %v1047 = vadd.f32 %v878, %v1046
      %1048 = vmatmul.bf16.gmra.mxu0 %v594
      %v1049 = vpop.f32.mrf.mxu0
      %v1050 = vadd.f32 %v881, %v1049
      %v1051 = vpop.f32.mrf.mxu0
      %v1052 = vadd.f32 %v883, %v1051
      %1053 = vmatmul.bf16.gmra.mxu0 %v596
      %v1054 = vpop.f32.mrf.mxu0
      %v1055 = vadd.f32 %v886, %v1054
      %v1056 = vpop.f32.mrf.mxu0
      %v1057 = vadd.f32 %v888, %v1056
      %1058 = vmatmul.bf16.gmra.mxu0 %v598
      %v1059 = vpop.f32.mrf.mxu0
      %v1060 = vadd.f32 %v891, %v1059
      %v1061 = vpop.f32.mrf.mxu0
      %v1062 = vadd.f32 %v893, %v1061
      %1063 = vmatmul.bf16.gmra.mxu0 %v600
      %v1064 = vpop.f32.mrf.mxu0
      %v1065 = vadd.f32 %v896, %v1064
      %v1066 = vpop.f32.mrf.mxu0
      %v1067 = vadd.f32 %v898, %v1066
      %1068 = vmatmul.bf16.gmra.mxu0 %v602
      %v1069 = vpop.f32.mrf.mxu0
      %v1070 = vadd.f32 %v901, %v1069
      %v1071 = vpop.f32.mrf.mxu0
      %v1072 = vadd.f32 %v903, %v1071
      %1073 = vmatmul.bf16.gmra.mxu0 %v604
      %v1074 = vpop.f32.mrf.mxu0
      %v1075 = vadd.f32 %v906, %v1074
      %v1076 = vpop.f32.mrf.mxu0
      %v1077 = vadd.f32 %v908, %v1076
      %1078 = vmatmul.bf16.gmra.mxu0 %v606
      %v1079 = vpop.f32.mrf.mxu0
      %v1080 = vadd.f32 %v911, %v1079
      %v1081 = vpop.f32.mrf.mxu0
      %v1082 = vadd.f32 %v913, %v1081
      %1083 = vmatmul.bf16.gmra.mxu0 %v608
      %v1084 = vpop.f32.mrf.mxu0
      %v1085 = vadd.f32 %v916, %v1084
      %v1086 = vpop.f32.mrf.mxu0
      %v1087 = vadd.f32 %v918, %v1086
      %1088 = vmatmul.bf16.gmra.mxu0 %v610
      %v1089 = vpop.f32.mrf.mxu0
      %v1090 = vadd.f32 %v921, %v1089
      %v1091 = vpop.f32.mrf.mxu0
      %v1092 = vadd.f32 %v923, %v1091
      %1093 = vmatmul.bf16.gmra.mxu0 %v612
      %v1094 = vpop.f32.mrf.mxu0
      %v1095 = vadd.f32 %v926, %v1094
      %v1096 = vpop.f32.mrf.mxu0
      %v1097 = vadd.f32 %v928, %v1096
      %1098 = vmatmul.bf16.gmra.mxu0 %v614
      %v1099 = vpop.f32.mrf.mxu0
      %v1100 = vadd.f32 %v931, %v1099
      %v1101 = vpop.f32.mrf.mxu0
      %v1102 = vadd.f32 %v933, %v1101
      %1103 = vmatmul.bf16.gmra.mxu0 %v616
      %v1104 = vpop.f32.mrf.mxu0
      %v1105 = vadd.f32 %v936, %v1104
      %v1106 = vpop.f32.mrf.mxu0
      %v1107 = vadd.f32 %v938, %v1106
      %1108 = vmatmul.bf16.gmra.mxu0 %v618
      %v1109 = vpop.f32.mrf.mxu0
      %v1110 = vadd.f32 %v941, %v1109
      %v1111 = vpop.f32.mrf.mxu0
      %v1112 = vadd.f32 %v943, %v1111
      %1113 = vmatmul.bf16.gmra.mxu0 %v620
      %v1114 = vpop.f32.mrf.mxu0
      %v1115 = vadd.f32 %v946, %v1114
      %v1116 = vpop.f32.mrf.mxu0
      %v1117 = vadd.f32 %v948, %v1116
      %1118 = vdwg.mxu0
      %v1119 = vld [vmem:[%s256] sm:$0x1]
      %v1121 = vperm.slane %v1119, 0
      %v1123 = vmul.f32 %v960, %v1121
      %v1124 = vmul.f32 %v962, %v1121
      %v1125 = vmul.f32 %v965, %v1121
      %v1126 = vmul.f32 %v967, %v1121
      %v1127 = vmul.f32 %v970, %v1121
      %v1128 = vmul.f32 %v972, %v1121
      %v1129 = vmul.f32 %v975, %v1121
      %v1130 = vmul.f32 %v977, %v1121
      %v1131 = vmul.f32 %v980, %v1121
      %v1132 = vmul.f32 %v982, %v1121
      %v1133 = vmul.f32 %v985, %v1121
      %v1134 = vmul.f32 %v987, %v1121
      %v1135 = vmul.f32 %v990, %v1121
      %v1136 = vmul.f32 %v992, %v1121
      %v1137 = vmul.f32 %v995, %v1121
      %v1138 = vmul.f32 %v997, %v1121
      %v1139 = vmul.f32 %v1000, %v1121
      %v1140 = vmul.f32 %v1002, %v1121
      %v1141 = vmul.f32 %v1005, %v1121
      %v1142 = vmul.f32 %v1007, %v1121
      %v1143 = vmul.f32 %v1010, %v1121
      %v1144 = vmul.f32 %v1012, %v1121
      %v1145 = vmul.f32 %v1015, %v1121
      %v1146 = vmul.f32 %v1017, %v1121
      %v1147 = vmul.f32 %v1020, %v1121
      %v1148 = vmul.f32 %v1022, %v1121
      %v1149 = vmul.f32 %v1025, %v1121
      %v1150 = vmul.f32 %v1027, %v1121
      %v1151 = vmul.f32 %v1030, %v1121
      %v1152 = vmul.f32 %v1032, %v1121
      %v1153 = vmul.f32 %v1035, %v1121
      %v1154 = vmul.f32 %v1037, %v1121
      %v1155 = vmul.f32 %v1040, %v1121
      %v1156 = vmul.f32 %v1042, %v1121
      %v1157 = vmul.f32 %v1045, %v1121
      %v1158 = vmul.f32 %v1047, %v1121
      %v1159 = vmul.f32 %v1050, %v1121
      %v1160 = vmul.f32 %v1052, %v1121
      %v1161 = vmul.f32 %v1055, %v1121
      %v1162 = vmul.f32 %v1057, %v1121
      %v1163 = vmul.f32 %v1060, %v1121
      %v1164 = vmul.f32 %v1062, %v1121
      %v1165 = vmul.f32 %v1065, %v1121
      %v1166 = vmul.f32 %v1067, %v1121
      %v1167 = vmul.f32 %v1070, %v1121
      %v1168 = vmul.f32 %v1072, %v1121
      %v1169 = vmul.f32 %v1075, %v1121
      %v1170 = vmul.f32 %v1077, %v1121
      %v1171 = vmul.f32 %v1080, %v1121
      %v1172 = vmul.f32 %v1082, %v1121
      %v1173 = vmul.f32 %v1085, %v1121
      %v1174 = vmul.f32 %v1087, %v1121
      %v1175 = vmul.f32 %v1090, %v1121
      %v1176 = vmul.f32 %v1092, %v1121
      %v1177 = vmul.f32 %v1095, %v1121
      %v1178 = vmul.f32 %v1097, %v1121
      %v1179 = vmul.f32 %v1100, %v1121
      %v1180 = vmul.f32 %v1102, %v1121
      %v1181 = vmul.f32 %v1105, %v1121
      %v1182 = vmul.f32 %v1107, %v1121
      %v1183 = vmul.f32 %v1110, %v1121
      %v1184 = vmul.f32 %v1112, %v1121
      %v1185 = vmul.f32 %v1115, %v1121
      %v1186 = vmul.f32 %v1117, %v1121
      %v1187 = vld [vmem:[%s259] sm:$0x1]
      %v1189 = vperm.slane %v1187, 0
      %v1191 = vadd.f32 %v1123, %v1189
      %v1192 = vadd.f32 %v1124, %v1189
      %v1193 = vadd.f32 %v1125, %v1189
      %v1194 = vadd.f32 %v1126, %v1189
      %v1195 = vadd.f32 %v1127, %v1189
      %v1196 = vadd.f32 %v1128, %v1189
      %v1197 = vadd.f32 %v1129, %v1189
      %v1198 = vadd.f32 %v1130, %v1189
      %v1199 = vadd.f32 %v1131, %v1189
      %v1200 = vadd.f32 %v1132, %v1189
      %v1201 = vadd.f32 %v1133, %v1189
      %v1202 = vadd.f32 %v1134, %v1189
      %v1203 = vadd.f32 %v1135, %v1189
      %v1204 = vadd.f32 %v1136, %v1189
      %v1205 = vadd.f32 %v1137, %v1189
      %v1206 = vadd.f32 %v1138, %v1189
      %v1207 = vadd.f32 %v1139, %v1189
      %v1208 = vadd.f32 %v1140, %v1189
      %v1209 = vadd.f32 %v1141, %v1189
      %v1210 = vadd.f32 %v1142, %v1189
      %v1211 = vadd.f32 %v1143, %v1189
      %v1212 = vadd.f32 %v1144, %v1189
      %v1213 = vadd.f32 %v1145, %v1189
      %v1214 = vadd.f32 %v1146, %v1189
      %v1215 = vadd.f32 %v1147, %v1189
      %v1216 = vadd.f32 %v1148, %v1189
      %v1217 = vadd.f32 %v1149, %v1189
      %v1218 = vadd.f32 %v1150, %v1189
      %v1219 = vadd.f32 %v1151, %v1189
      %v1220 = vadd.f32 %v1152, %v1189
      %v1221 = vadd.f32 %v1153, %v1189
      %v1222 = vadd.f32 %v1154, %v1189
      %v1223 = vadd.f32 %v1155, %v1189
      %v1224 = vadd.f32 %v1156, %v1189
      %v1225 = vadd.f32 %v1157, %v1189
      %v1226 = vadd.f32 %v1158, %v1189
      %v1227 = vadd.f32 %v1159, %v1189
      %v1228 = vadd.f32 %v1160, %v1189
      %v1229 = vadd.f32 %v1161, %v1189
      %v1230 = vadd.f32 %v1162, %v1189
      %v1231 = vadd.f32 %v1163, %v1189
      %v1232 = vadd.f32 %v1164, %v1189
      %v1233 = vadd.f32 %v1165, %v1189
      %v1234 = vadd.f32 %v1166, %v1189
      %v1235 = vadd.f32 %v1167, %v1189
      %v1236 = vadd.f32 %v1168, %v1189
      %v1237 = vadd.f32 %v1169, %v1189
      %v1238 = vadd.f32 %v1170, %v1189
      %v1239 = vadd.f32 %v1171, %v1189
      %v1240 = vadd.f32 %v1172, %v1189
      %v1241 = vadd.f32 %v1173, %v1189
      %v1242 = vadd.f32 %v1174, %v1189
      %v1243 = vadd.f32 %v1175, %v1189
      %v1244 = vadd.f32 %v1176, %v1189
      %v1245 = vadd.f32 %v1177, %v1189
      %v1246 = vadd.f32 %v1178, %v1189
      %v1247 = vadd.f32 %v1179, %v1189
      %v1248 = vadd.f32 %v1180, %v1189
      %v1249 = vadd.f32 %v1181, %v1189
      %v1250 = vadd.f32 %v1182, %v1189
      %v1251 = vadd.f32 %v1183, %v1189
      %v1252 = vadd.f32 %v1184, %v1189
      %v1253 = vadd.f32 %v1185, %v1189
      %v1254 = vadd.f32 %v1186, %v1189
      %v1255 = vmax.f32 %v1191, 0.0
      %v1256 = vmax.f32 %v1192, 0.0
      %v1257 = vmax.f32 %v1193, 0.0
      %v1258 = vmax.f32 %v1194, 0.0
      %v1259 = vmax.f32 %v1195, 0.0
      %v1260 = vmax.f32 %v1196, 0.0
      %v1261 = vmax.f32 %v1197, 0.0
      %v1262 = vmax.f32 %v1198, 0.0
      %v1263 = vmax.f32 %v1199, 0.0
      %v1264 = vmax.f32 %v1200, 0.0
      %v1265 = vmax.f32 %v1201, 0.0
      %v1266 = vmax.f32 %v1202, 0.0
      %v1267 = vmax.f32 %v1203, 0.0
      %v1268 = vmax.f32 %v1204, 0.0
      %v1269 = vmax.f32 %v1205, 0.0
      %v1270 = vmax.f32 %v1206, 0.0
      %v1271 = vmax.f32 %v1207, 0.0
      %v1272 = vmax.f32 %v1208, 0.0
      %v1273 = vmax.f32 %v1209, 0.0
      %v1274 = vmax.f32 %v1210, 0.0
      %v1275 = vmax.f32 %v1211, 0.0
      %v1276 = vmax.f32 %v1212, 0.0
      %v1277 = vmax.f32 %v1213, 0.0
      %v1278 = vmax.f32 %v1214, 0.0
      %v1279 = vmax.f32 %v1215, 0.0
      %v1280 = vmax.f32 %v1216, 0.0
      %v1281 = vmax.f32 %v1217, 0.0
      %v1282 = vmax.f32 %v1218, 0.0
      %v1283 = vmax.f32 %v1219, 0.0
      %v1284 = vmax.f32 %v1220, 0.0
      %v1285 = vmax.f32 %v1221, 0.0
      %v1286 = vmax.f32 %v1222, 0.0
      %v1287 = vmax.f32 %v1223, 0.0
      %v1288 = vmax.f32 %v1224, 0.0
      %v1289 = vmax.f32 %v1225, 0.0
      %v1290 = vmax.f32 %v1226, 0.0
      %v1291 = vmax.f32 %v1227, 0.0
      %v1292 = vmax.f32 %v1228, 0.0
      %v1293 = vmax.f32 %v1229, 0.0
      %v1294 = vmax.f32 %v1230, 0.0
      %v1295 = vmax.f32 %v1231, 0.0
      %v1296 = vmax.f32 %v1232, 0.0
      %v1297 = vmax.f32 %v1233, 0.0
      %v1298 = vmax.f32 %v1234, 0.0
      %v1299 = vmax.f32 %v1235, 0.0
      %v1300 = vmax.f32 %v1236, 0.0
      %v1301 = vmax.f32 %v1237, 0.0
      %v1302 = vmax.f32 %v1238, 0.0
      %v1303 = vmax.f32 %v1239, 0.0
      %v1304 = vmax.f32 %v1240, 0.0
      %v1305 = vmax.f32 %v1241, 0.0
      %v1306 = vmax.f32 %v1242, 0.0
      %v1307 = vmax.f32 %v1243, 0.0
      %v1308 = vmax.f32 %v1244, 0.0
      %v1309 = vmax.f32 %v1245, 0.0
      %v1310 = vmax.f32 %v1246, 0.0
      %v1311 = vmax.f32 %v1247, 0.0
      %v1312 = vmax.f32 %v1248, 0.0
      %v1313 = vmax.f32 %v1249, 0.0
      %v1314 = vmax.f32 %v1250, 0.0
      %v1315 = vmax.f32 %v1251, 0.0
      %v1316 = vmax.f32 %v1252, 0.0
      %v1317 = vmax.f32 %v1253, 0.0
      %v1318 = vmax.f32 %v1254, 0.0
      %v1319 = vpack.c.bf16 %v1255, %v1255
      %v1320 = vpack.c.bf16 %v1256, %v1256
      %v1321 = vpack.c.bf16 %v1257, %v1257
      %v1322 = vpack.c.bf16 %v1258, %v1258
      %v1323 = vpack.c.bf16 %v1259, %v1259
      %v1324 = vpack.c.bf16 %v1260, %v1260
      %v1325 = vpack.c.bf16 %v1261, %v1261
      %v1326 = vpack.c.bf16 %v1262, %v1262
      %v1327 = vpack.c.bf16 %v1263, %v1263
      %v1328 = vpack.c.bf16 %v1264, %v1264
      %v1329 = vpack.c.bf16 %v1265, %v1265
      %v1330 = vpack.c.bf16 %v1266, %v1266
      %v1331 = vpack.c.bf16 %v1267, %v1267
      %v1332 = vpack.c.bf16 %v1268, %v1268
      %v1333 = vpack.c.bf16 %v1269, %v1269
      %v1334 = vpack.c.bf16 %v1270, %v1270
      %v1335 = vpack.c.bf16 %v1271, %v1271
      %v1336 = vpack.c.bf16 %v1272, %v1272
      %v1337 = vpack.c.bf16 %v1273, %v1273
      %v1338 = vpack.c.bf16 %v1274, %v1274
      %v1339 = vpack.c.bf16 %v1275, %v1275
      %v1340 = vpack.c.bf16 %v1276, %v1276
      %v1341 = vpack.c.bf16 %v1277, %v1277
      %v1342 = vpack.c.bf16 %v1278, %v1278
      %v1343 = vpack.c.bf16 %v1279, %v1279
      %v1344 = vpack.c.bf16 %v1280, %v1280
      %v1345 = vpack.c.bf16 %v1281, %v1281
      %v1346 = vpack.c.bf16 %v1282, %v1282
      %v1347 = vpack.c.bf16 %v1283, %v1283
      %v1348 = vpack.c.bf16 %v1284, %v1284
      %v1349 = vpack.c.bf16 %v1285, %v1285
      %v1350 = vpack.c.bf16 %v1286, %v1286
      %v1351 = vpack.c.bf16 %v1287, %v1287
      %v1352 = vpack.c.bf16 %v1288, %v1288
      %v1353 = vpack.c.bf16 %v1289, %v1289
      %v1354 = vpack.c.bf16 %v1290, %v1290
      %v1355 = vpack.c.bf16 %v1291, %v1291
      %v1356 = vpack.c.bf16 %v1292, %v1292
      %v1357 = vpack.c.bf16 %v1293, %v1293
      %v1358 = vpack.c.bf16 %v1294, %v1294
      %v1359 = vpack.c.bf16 %v1295, %v1295
      %v1360 = vpack.c.bf16 %v1296, %v1296
      %v1361 = vpack.c.bf16 %v1297, %v1297
      %v1362 = vpack.c.bf16 %v1298, %v1298
      %v1363 = vpack.c.bf16 %v1299, %v1299
      %v1364 = vpack.c.bf16 %v1300, %v1300
      %v1365 = vpack.c.bf16 %v1301, %v1301
      %v1366 = vpack.c.bf16 %v1302, %v1302
      %v1367 = vpack.c.bf16 %v1303, %v1303
      %v1368 = vpack.c.bf16 %v1304, %v1304
      %v1369 = vpack.c.bf16 %v1305, %v1305
      %v1370 = vpack.c.bf16 %v1306, %v1306
      %v1371 = vpack.c.bf16 %v1307, %v1307
      %v1372 = vpack.c.bf16 %v1308, %v1308
      %v1373 = vpack.c.bf16 %v1309, %v1309
      %v1374 = vpack.c.bf16 %v1310, %v1310
      %v1375 = vpack.c.bf16 %v1311, %v1311
      %v1376 = vpack.c.bf16 %v1312, %v1312
      %v1377 = vpack.c.bf16 %v1313, %v1313
      %v1378 = vpack.c.bf16 %v1314, %v1314
      %v1379 = vpack.c.bf16 %v1315, %v1315
      %v1380 = vpack.c.bf16 %v1316, %v1316
      %v1381 = vpack.c.bf16 %v1317, %v1317
      %v1382 = vpack.c.bf16 %v1318, %v1318
      %1383 = vst [vmem:[%s267] sm:$0xf] %v1319
      %1384 = vst [vmem:[%s267 + $0x4] sm:$0xf] %v1320
      %1385 = vst [vmem:[%s267 + $0x8] sm:$0xf] %v1321
      %1386 = vst [vmem:[%s267 + $0xc] sm:$0xf] %v1322
      %1387 = vst [vmem:[%s267 + $0x10] sm:$0xf] %v1323
      %1388 = vst [vmem:[%s267 + $0x14] sm:$0xf] %v1324
      %1389 = vst [vmem:[%s267 + $0x18] sm:$0xf] %v1325
      %1390 = vst [vmem:[%s267 + $0x1c] sm:$0xf] %v1326
      %1391 = vst [vmem:[%s267 + $0x20] sm:$0xf] %v1327
      %1392 = vst [vmem:[%s267 + $0x24] sm:$0xf] %v1328
      %1393 = vst [vmem:[%s267 + $0x28] sm:$0xf] %v1329
      %1394 = vst [vmem:[%s267 + $0x2c] sm:$0xf] %v1330
      %1395 = vst [vmem:[%s267 + $0x30] sm:$0xf] %v1331
      %1396 = vst [vmem:[%s267 + $0x34] sm:$0xf] %v1332
      %1397 = vst [vmem:[%s267 + $0x38] sm:$0xf] %v1333
      %1398 = vst [vmem:[%s267 + $0x3c] sm:$0xf] %v1334
      %1399 = vst [vmem:[%s267 + $0x40] sm:$0xf] %v1335
      %1400 = vst [vmem:[%s267 + $0x44] sm:$0xf] %v1336
      %1401 = vst [vmem:[%s267 + $0x48] sm:$0xf] %v1337
      %1402 = vst [vmem:[%s267 + $0x4c] sm:$0xf] %v1338
      %1403 = vst [vmem:[%s267 + $0x50] sm:$0xf] %v1339
      %1404 = vst [vmem:[%s267 + $0x54] sm:$0xf] %v1340
      %1405 = vst [vmem:[%s267 + $0x58] sm:$0xf] %v1341
      %1406 = vst [vmem:[%s267 + $0x5c] sm:$0xf] %v1342
      %1407 = vst [vmem:[%s267 + $0x60] sm:$0xf] %v1343
      %1408 = vst [vmem:[%s267 + $0x64] sm:$0xf] %v1344
      %1409 = vst [vmem:[%s267 + $0x68] sm:$0xf] %v1345
      %1410 = vst [vmem:[%s267 + $0x6c] sm:$0xf] %v1346
      %1411 = vst [vmem:[%s267 + $0x70] sm:$0xf] %v1347
      %1412 = vst [vmem:[%s267 + $0x74] sm:$0xf] %v1348
      %1413 = vst [vmem:[%s267 + $0x78] sm:$0xf] %v1349
      %1414 = vst [vmem:[%s267 + $0x7c] sm:$0xf] %v1350
      %1415 = vst [vmem:[%s267 + $0x80] sm:$0xf] %v1351
      %1416 = vst [vmem:[%s267 + $0x84] sm:$0xf] %v1352
      %1417 = vst [vmem:[%s267 + $0x88] sm:$0xf] %v1353
      %1418 = vst [vmem:[%s267 + $0x8c] sm:$0xf] %v1354
      %1419 = vst [vmem:[%s267 + $0x90] sm:$0xf] %v1355
      %1420 = vst [vmem:[%s267 + $0x94] sm:$0xf] %v1356
      %1421 = vst [vmem:[%s267 + $0x98] sm:$0xf] %v1357
      %1422 = vst [vmem:[%s267 + $0x9c] sm:$0xf] %v1358
      %1423 = vst [vmem:[%s267 + $0xa0] sm:$0xf] %v1359
      %1424 = vst [vmem:[%s267 + $0xa4] sm:$0xf] %v1360
      %1425 = vst [vmem:[%s267 + $0xa8] sm:$0xf] %v1361
      %1426 = vst [vmem:[%s267 + $0xac] sm:$0xf] %v1362
      %1427 = vst [vmem:[%s267 + $0xb0] sm:$0xf] %v1363
      %1428 = vst [vmem:[%s267 + $0xb4] sm:$0xf] %v1364
      %1429 = vst [vmem:[%s267 + $0xb8] sm:$0xf] %v1365
      %1430 = vst [vmem:[%s267 + $0xbc] sm:$0xf] %v1366
      %1431 = vst [vmem:[%s267 + $0xc0] sm:$0xf] %v1367
      %1432 = vst [vmem:[%s267 + $0xc4] sm:$0xf] %v1368
      %1433 = vst [vmem:[%s267 + $0xc8] sm:$0xf] %v1369
      %1434 = vst [vmem:[%s267 + $0xcc] sm:$0xf] %v1370
      %1435 = vst [vmem:[%s267 + $0xd0] sm:$0xf] %v1371
      %1436 = vst [vmem:[%s267 + $0xd4] sm:$0xf] %v1372
      %1437 = vst [vmem:[%s267 + $0xd8] sm:$0xf] %v1373
      %1438 = vst [vmem:[%s267 + $0xdc] sm:$0xf] %v1374
      %1439 = vst [vmem:[%s267 + $0xe0] sm:$0xf] %v1375
      %1440 = vst [vmem:[%s267 + $0xe4] sm:$0xf] %v1376
      %1441 = vst [vmem:[%s267 + $0xe8] sm:$0xf] %v1377
      %1442 = vst [vmem:[%s267 + $0xec] sm:$0xf] %v1378
      %1443 = vst [vmem:[%s267 + $0xf0] sm:$0xf] %v1379
      %1444 = vst [vmem:[%s267 + $0xf4] sm:$0xf] %v1380
      %1445 = vst [vmem:[%s267 + $0xf8] sm:$0xf] %v1381
      %1446 = vst [vmem:[%s267 + $0xfc] sm:$0xf] %v1382
      %s1447 = smul.u32 64, %s19
      %p1448 = scmp.lt.s32.totalorder %s1447, 511
      %s1449 = scalar_select %p1448, %s1447, 511
      %p1450 = scmp.lt.s32.totalorder %s20, 0
      %s1451 = scalar_select %p1450, %s20, 0
      %s1452 = sadd.s32 %s1451, %s1449
      %s1453 = smul.addr %s1452, 4
      %s1454 = scalar_lea.vmem %s4, %s1453
      // Predicated region
      $region37: #{stem_forward.1} parent=35 // pred_check
        %p1455 = pneg %p151
      $region38: #{stem_forward.1} parent=35 // pred_check_branch
        %1457 = sbr.rel (%p1455) target = $region40
      $region39: #{stem_forward.1} parent=35 // pred_region
        %s1458 = smul.u32 64, %s19
      $region40: #{stem_forward.1} parent=35 // pred_fallthru
        _
    $region36: #{stem_forward.1} parent=5 // pred_fallthru
      _
    %p1459 = scmp.le.s32.totalorder 2, %s10
    // Predicated region
    $region41: #{stem_forward.1} parent=5 // pred_check
      %p1460 = pneg %p1459
    $region42: #{stem_forward.1} parent=5 // pred_check_branch
      %1462 = sbr.rel (%p1460) target = $region44
    $region43: #{stem_forward.1} parent=5 // pred_region
      %s1463 = ssub.s32 %s10, 2
      // Predicated region
      $region45: #{stem_forward.1} parent=43 // pred_check
        %p1464 = pneg %p157
      $region46: #{stem_forward.1} parent=43 // pred_check_branch
        %1466 = sbr.rel (%p1464) target = $region48
      $region47: #{stem_forward.1} parent=43 // pred_region
        %s1467 = smul.u32 64, %s21
        %p1468 = scmp.lt.s32.totalorder %s1467, 511
        %s1469 = scalar_select %p1468, %s1467, 511
        %p1470 = scmp.lt.s32.totalorder %s22, 0
        %s1471 = scalar_select %p1470, %s22, 0
        %s1472 = sadd.s32 %s1471, %s1469
        %s1473 = smul.addr %s1472, 4
        %s1474 = scalar_lea.vmem %s4, %s1473
      $region48: #{stem_forward.1} parent=43 // pred_fallthru
        _
    $region44: #{stem_forward.1} parent=5 // pred_fallthru
      _
  $region6: #{stem_forward.1} parent=0 // loop_footer
    %s14 = sadd.s32 1, %s10
  $region7: #{stem_forward.1} parent=0 // loop_footer_branch
    %9 = sbr.rel target = $region3
  $region8: #{stem_forward.1} parent=0 // loop_exit
    _

</llo_original>
